<compile_context>
chip_gen: v6e
topology: v6e:2x2x1
jax: 0.10.0
libtpu: 0.0.40
codegen_flags: <defaults>
</compile_context>

<pallas_src>
from functools import partial

import numpy as np

import jax
import jax.numpy as jnp
from jax.experimental import pallas as pl
from jax.experimental.pallas import tpu as pltpu


def _sigmoid(v):
    # exp and the approximate reciprocal both issue on the EUP slot, which is
    # idle relative to the VALU in this kernel.
    return pl.reciprocal(1.0 + jnp.exp(-v), approx=True)


def _swish(v):
    return v * _sigmoid(v)


def _tree_sum(terms):
    # Pairwise tree reduction: exposes ILP to the 4-wide VALU instead of a
    # 9-deep serial dependent add chain.
    while len(terms) > 1:
        nxt = [terms[i] + terms[i + 1] for i in range(0, len(terms) - 1, 2)]
        if len(terms) % 2:
            nxt.append(terms[-1])
        terms = nxt
    return terms[0]


def mbconv_kernel(x_ref, mask_ref, wexp_ref, b0_ref, wdw_ref, b1_ref,
                  wsr_ref, bsr_ref, wse_ref, bse_ref,
                  wproj_ref, b2_ref, out_ref,
                  *, W, HW, B, KH, KW, pad_top, pad_left, use_skip, mxu_dtype):
    X = B * HW
    x = x_ref[0]                                        # (C_in, B*HW) f32, lane-dense

    # ---- expand 1x1 conv (BN0 scale folded into weights) + bias + swish ----
    xm = jnp.dot(wexp_ref[...], x.astype(mxu_dtype),
                 preferred_element_type=jnp.float32) + b0_ref[...]
    xm = _swish(xm)                                     # (C_mid, X) f32

    # ---- depthwise KxK conv, stride 1, "same" padding (BN1 scale folded) ----
    # Each tap: one pltpu.roll of the flattened spatial axis (XLU) plus one
    # precomputed (1, X) validity mask covering both h and w image borders
    # (which also covers any cross-image / wrap-around contamination of the
    # roll), then a per-channel (sublane) weight multiply.
    wdw = wdw_ref[...]                                  # (C_mid, KH*KW) f32
    taps = []
    for kh in range(KH):
        dh = kh - pad_top
        for kw in range(KW):
            dw = kw - pad_left
            idx = kh * KW + kw
            s = dh * W + dw                             # flat source offset
            if s == 0:
                tap = xm
            else:
                # want tap[p] = xm[p + s]  ==  np.roll(xm, -s) along lanes
                tap = pltpu.roll(xm, shift=(-s) % X, axis=1)
            m = mask_ref[idx:idx + 1, :]                # (1, X) f32, sublane bcast
            taps.append(tap * m * wdw[:, idx:idx + 1])
    xd = _tree_sum(taps) + b1_ref[...]
    xd = _swish(xd)                                     # (C_mid, X) f32

    # ---- squeeze & excitation (per image; tiny contractions on VPU/XLU) ----
    if B == 1:
        segs = [xd]
    else:
        segs = [xd[:, b * HW:(b + 1) * HW] for b in range(B)]  # lane-aligned slices
    scaled = []
    for seg in segs:
        xsq = jnp.mean(seg, axis=1, keepdims=True)                               # (C_mid, 1)
        xr = jnp.sum(xsq * wsr_ref[...], axis=0, keepdims=True) + bsr_ref[...]   # (1, C_sq)
        xr = _swish(xr)
        xe = jnp.sum(wse_ref[...] * xr, axis=1, keepdims=True) + bse_ref[...]    # (C_mid, 1)
        scaled.append(seg * _sigmoid(xe))               # per-channel (sublane) scale
    xd = scaled[0] if B == 1 else jnp.concatenate(scaled, axis=1)

    # ---- project 1x1 conv (BN2 scale folded) + bias + identity skip ----
    xp = jnp.dot(wproj_ref[...], xd.astype(mxu_dtype),
                 preferred_element_type=jnp.float32) + b2_ref[...]
    if use_skip:
        xp = xp + x                                     # stride 1, C_in == C_out
    out_ref[0] = xp                                     # (C_out, X), full-lane store


def _device_tuning():
    """Pick per-grid-step image batching and MXU operand dtype per TPU gen."""
    try:
        kind = jax.devices()[0].device_kind.lower()
    except Exception:
        kind = ""
    # v5e / v6e have a single TensorCore: fold 2 images per grid step to
    # amortize per-step pipeline overhead.  v7x (2 TCs) and v4/v5p (megacore)
    # keep a batch-parallel grid so both cores get independent blocks.
    single_tc = any(t in kind for t in ("v5 lite", "v5e", "v6 lite", "v6e"))
    # bf16 MXU operands are native on v6e / v7x; elementwise math stays f32.
    mxu_bf16 = ("v6" in kind) or ("v7" in kind)
    return single_tc, mxu_bf16


def _dw_masks(H, W, KH, KW, pad_top, pad_left, B):
    """Host-precomputed (KH*KW, B*H*W) f32 masks: one combined (h,w) validity
    mask per depthwise tap, tiled over the B images sharing the lane axis."""
    hh = np.arange(H)[:, None]
    ww = np.arange(W)[None, :]
    rows = []
    for kh in range(KH):
        dh = kh - pad_top
        for kw in range(KW):
            dw = kw - pad_left
            ok = ((hh + dh >= 0) & (hh + dh < H) &
                  (ww + dw >= 0) & (ww + dw < W))
            rows.append(np.tile(ok.reshape(-1), B).astype(np.float32))
    return jnp.asarray(np.stack(rows))                  # (KH*KW, B*H*W)


def mbconv_pallas(x_nchw, p, *, kernel_size):
    N, C_in, H, W = x_nchw.shape
    C_mid = p["w_expand"].shape[1]
    C_out = p["w_proj"].shape[1]
    KH = KW = kernel_size
    assert kernel_size % 2 == 1, "odd 'same' kernel / stride 1 only"
    pad_top, pad_left = (KH - 1) // 2, (KW - 1) // 2
    HW = H * W

    single_tc, mxu_bf16 = _device_tuning()
    B = 2 if (single_tc and N % 2 == 0 and N >= 2) else 1
    G = N // B
    X = B * HW
    mxu_dtype = jnp.bfloat16 if mxu_bf16 else jnp.float32

    # ---- fold BN scales into adjacent conv weights; move to channel-major ----
    w_exp_t = jnp.transpose(p["w_expand"] * p["s0"]).astype(mxu_dtype)  # (C_mid, C_in)
    b0_col = jnp.reshape(p["b0"], (C_mid, 1))
    wdw_f = p["w_dw"] * jnp.reshape(p["s1"], (1, 1, C_mid))             # BN1 scale folded
    wdw_cm = jnp.transpose(jnp.reshape(wdw_f, (KH * KW, C_mid)))        # (C_mid, KH*KW)
    b1_col = jnp.reshape(p["b1"], (C_mid, 1))
    w_sr = p["w_sr"]                                                    # (C_mid, C_sq)
    b_sr = jnp.reshape(p["b_sr"], (1, -1))
    w_se_t = jnp.transpose(p["w_se"])                                   # (C_mid, C_sq)
    b_se_col = jnp.reshape(p["b_se"], (C_mid, 1))
    w_proj_t = jnp.transpose(p["w_proj"] * p["s2"]).astype(mxu_dtype)   # (C_out, C_mid)
    b2_col = jnp.reshape(p["b2"], (C_out, 1))

    masks = _dw_masks(H, W, KH, KW, pad_top, pad_left, B)               # (KH*KW, X)

    # Group B images per grid step along the (lane-dense) spatial axis.
    x_grp = jnp.reshape(
        jnp.transpose(jnp.reshape(x_nchw, (G, B, C_in, HW)), (0, 2, 1, 3)),
        (G, C_in, X))
    use_skip = (C_in == C_out)

    kern = partial(mbconv_kernel, W=W, HW=HW, B=B, KH=KH, KW=KW,
                   pad_top=pad_top, pad_left=pad_left, use_skip=use_skip,
                   mxu_dtype=mxu_dtype)

    def full(arr):
        shp = arr.shape
        return pl.BlockSpec(shp, lambda g, _s=shp: (0,) * len(_s))

    out = pl.pallas_call(
        kern,
        out_shape=jax.ShapeDtypeStruct((G, C_out, X), jnp.float32),
        grid_spec=pltpu.PrefetchScalarGridSpec(
            num_scalar_prefetch=0,
            grid=(G,),
            in_specs=[
                pl.BlockSpec((1, C_in, X), lambda g: (g, 0, 0)),
                full(masks),
                full(w_exp_t), full(b0_col),
                full(wdw_cm), full(b1_col),
                full(w_sr), full(b_sr), full(w_se_t), full(b_se_col),
                full(w_proj_t), full(b2_col),
            ],
            out_specs=pl.BlockSpec((1, C_out, X), lambda g: (g, 0, 0)),
        ),
        # grid blocks are fully independent -> parallel (uses both TCs on v7x)
        compiler_params=pltpu.CompilerParams(dimension_semantics=("parallel",)),
    )(x_grp, masks, w_exp_t, b0_col, wdw_cm, b1_col,
      w_sr, b_sr, w_se_t, b_se_col, w_proj_t, b2_col)

    out = jnp.reshape(
        jnp.transpose(jnp.reshape(out, (G, C_out, B, HW)), (0, 2, 1, 3)),
        (N, C_out, H, W))
    return out


def init_params(key, C_in, C_out, expand_ratio, kernel_size, se_ratio, eps):
    C_mid = C_in * expand_ratio
    C_sq = max(1, int(C_in * se_ratio))
    ks = list(jax.random.split(key, 12))

    def nrm(k, shape, scale=0.1):
        return scale * jax.random.normal(k, shape, jnp.float32)

    def bn(k, C):
        k1, k2, k3, k4 = jax.random.split(k, 4)
        gamma = 1.0 + 0.1 * jax.random.normal(k1, (C,), jnp.float32)
        beta = 0.1 * jax.random.normal(k2, (C,), jnp.float32)
        mean = 0.1 * jax.random.normal(k3, (C,), jnp.float32)
        var = jax.random.uniform(k4, (C,), jnp.float32, minval=0.5, maxval=1.5)
        scale = gamma / jnp.sqrt(var + eps)
        bias = beta - mean * scale
        return scale.reshape(1, C), bias.reshape(1, C)

    s0, b0 = bn(ks[0], C_mid)
    s1, b1 = bn(ks[1], C_mid)
    s2, b2 = bn(ks[2], C_out)
    return dict(
        w_expand=nrm(ks[3], (C_in, C_mid)),              # 1x1: W[cout,cin,0,0] -> [cin,cout]
        s0=s0, b0=b0,
        w_dw=nrm(ks[4], (kernel_size, kernel_size, C_mid)),  # depthwise W[c,0,kh,kw] -> [kh,kw,c]
        s1=s1, b1=b1,
        w_sr=nrm(ks[5], (C_mid, C_sq)), b_sr=nrm(ks[6], (1, C_sq)),
        w_se=nrm(ks[7], (C_sq, C_mid)), b_se=nrm(ks[8], (1, C_mid)),
        w_proj=nrm(ks[9], (C_mid, C_out)),
        s2=s2, b2=b2,
    )


def mbconv_reference(x_nhwc, p):
    """Pure-JAX reference (NHWC, f32, exact sigmoid) for validation."""
    C_mid = p["w_expand"].shape[1]
    x = jnp.einsum("nhwc,cd->nhwd", x_nhwc, p["w_expand"])
    x = x * p["s0"][0] + p["b0"][0]
    x = x * jax.nn.sigmoid(x)
    w = p["w_dw"][:, :, None, :]                         # HWIO, I=1 (depthwise)
    x = jax.lax.conv_general_dilated(
        x, w, window_strides=(1, 1), padding="SAME",
        dimension_numbers=("NHWC", "HWIO", "NHWC"),
        feature_group_count=C_mid)
    x = x * p["s1"][0] + p["b1"][0]
    x = x * jax.nn.sigmoid(x)
    xsq = jnp.mean(x, axis=(1, 2), keepdims=True)
    xr = jnp.einsum("nijc,cd->nijd", xsq, p["w_sr"]) + p["b_sr"][0]
    xr = xr * jax.nn.sigmoid(xr)
    xe = jnp.einsum("nijc,cd->nijd", xr, p["w_se"]) + p["b_se"][0]
    x = jax.nn.sigmoid(xe) * x
    x = jnp.einsum("nhwc,cd->nhwd", x, p["w_proj"])
    x = x * p["s2"][0] + p["b2"][0]
    return x + x_nhwc


if __name__ == "__main__":
    key = jax.random.PRNGKey(0)
    kx, kp = jax.random.split(key)

    # BlockArgs: num_repeat=1, kernel_size=3, stride=1, expand_ratio=4,
    #            input_filters=4, output_filters=4, se_ratio=0.25, id_skip=True
    N, C_in, H, W = 2, 4, 16, 16
    expand_ratio, kernel_size, se_ratio = 4, 3, 0.25
    C_out = C_in
    bn_eps = 1e-3

    x_nchw = jax.random.normal(kx, (N, C_in, H, W), jnp.float32)   # PyTorch NCHW input
    params = init_params(kp, C_in, C_out, expand_ratio, kernel_size, se_ratio, bn_eps)

    out_nchw = mbconv_pallas(x_nchw, params, kernel_size=kernel_size)
    out_nchw = jax.block_until_ready(out_nchw)
    assert out_nchw.shape == (N, C_out, H, W)

    # Validate against the exact f32 reference.  Tolerance: the kernel uses the
    # EUP approximate reciprocal for sigmoid (f32 path), and on v6e/v7x the
    # 1x1-conv MXU operands are bf16 (standard bf16-matmul tolerance).
    _, mxu_bf16 = _device_tuning()
    tol = 2e-2 if mxu_bf16 else 5e-3
    x_nhwc = jnp.transpose(x_nchw, (0, 2, 3, 1))
    ref_nchw = jnp.transpose(mbconv_reference(x_nhwc, params), (0, 3, 1, 2))
    err = float(jnp.max(jnp.abs(out_nchw - ref_nchw)))
    assert err < tol, f"max abs error too large: {err} (tol {tol})"
    print("KERNEL_OK")
</pallas_src>

<mosaic_0001>
module attributes {stable_mosaic.version = 11 : i64} {
  func.func @mbconv_kernel(%arg0: i32, %arg1: memref<1x4x256xf32, #tpu.memory_space<vmem>>, %arg2: memref<9x256xf32, #tpu.memory_space<vmem>>, %arg3: memref<16x4xf32, #tpu.memory_space<vmem>>, %arg4: memref<16x1xf32, #tpu.memory_space<vmem>>, %arg5: memref<16x9xf32, #tpu.memory_space<vmem>>, %arg6: memref<16x1xf32, #tpu.memory_space<vmem>>, %arg7: memref<16x1xf32, #tpu.memory_space<vmem>>, %arg8: memref<1x1xf32, #tpu.memory_space<vmem>>, %arg9: memref<16x1xf32, #tpu.memory_space<vmem>>, %arg10: memref<16x1xf32, #tpu.memory_space<vmem>>, %arg11: memref<4x16xf32, #tpu.memory_space<vmem>>, %arg12: memref<4x1xf32, #tpu.memory_space<vmem>>, %arg13: memref<1x4x256xf32, #tpu.memory_space<vmem>>) attributes {dimension_semantics = [#tpu.dimension_semantics<parallel>], iteration_bounds = array<i64: 2>, scalar_prefetch = 0 : i64, scratch_operands = 0 : i64, tpu.core_type = #tpu.core_type<tc>, window_params = [{transform_indices = @transform_0, window_bounds = array<i64: 1, 4, 256>}, {pipeline_mode = #tpu.pipeline_mode<synchronous>, transform_indices = @transform_1, window_bounds = array<i64: 9, 256>}, {pipeline_mode = #tpu.pipeline_mode<synchronous>, transform_indices = @transform_2, window_bounds = array<i64: 16, 4>}, {pipeline_mode = #tpu.pipeline_mode<synchronous>, transform_indices = @transform_3, window_bounds = array<i64: 16, 1>}, {pipeline_mode = #tpu.pipeline_mode<synchronous>, transform_indices = @transform_4, window_bounds = array<i64: 16, 9>}, {pipeline_mode = #tpu.pipeline_mode<synchronous>, transform_indices = @transform_5, window_bounds = array<i64: 16, 1>}, {pipeline_mode = #tpu.pipeline_mode<synchronous>, transform_indices = @transform_6, window_bounds = array<i64: 16, 1>}, {pipeline_mode = #tpu.pipeline_mode<synchronous>, transform_indices = @transform_7, window_bounds = array<i64: 1, 1>}, {pipeline_mode = #tpu.pipeline_mode<synchronous>, transform_indices = @transform_8, window_bounds = array<i64: 16, 1>}, {pipeline_mode = #tpu.pipeline_mode<synchronous>, transform_indices = @transform_9, window_bounds = array<i64: 16, 1>}, {pipeline_mode = #tpu.pipeline_mode<synchronous>, transform_indices = @transform_10, window_bounds = array<i64: 4, 16>}, {pipeline_mode = #tpu.pipeline_mode<synchronous>, transform_indices = @transform_11, window_bounds = array<i64: 4, 1>}, {transform_indices = @transform_12, window_bounds = array<i64: 1, 4, 256>}]} {
    %c0 = arith.constant 0 : index
    %c0_0 = arith.constant 0 : index
    %c0_1 = arith.constant 0 : index
    %0 = vector.load %arg1[%c0, %c0_0, %c0_1] : memref<1x4x256xf32, #tpu.memory_space<vmem>>, vector<1x4x256xf32>
    %1 = vector.shape_cast %0 : vector<1x4x256xf32> to vector<4x256xf32>
    %c0_2 = arith.constant 0 : index
    %c0_3 = arith.constant 0 : index
    %2 = vector.load %arg3[%c0_2, %c0_3] : memref<16x4xf32, #tpu.memory_space<vmem>>, vector<16x4xf32>
    %cst = arith.constant dense<0.000000e+00> : vector<16x256xf32>
    %3 = tpu.matmul %2, %1, %cst {dimension_numbers = #tpu.dot_dimension_numbers<[1], [0], [0], [1], [0, 0, 1, 1], [], []>} : vector<16x4xf32>, vector<4x256xf32>, vector<16x256xf32> -> vector<16x256xf32>
    %c0_4 = arith.constant 0 : index
    %c0_5 = arith.constant 0 : index
    %4 = vector.load %arg4[%c0_4, %c0_5] : memref<16x1xf32, #tpu.memory_space<vmem>>, vector<16x1xf32>
    %5 = vector.broadcast %4 : vector<16x1xf32> to vector<16x256xf32>
    %6 = arith.addf %3, %5 : vector<16x256xf32>
    %cst_6 = arith.constant 0.000000e+00 : f32
    %7 = vector.broadcast %cst_6 : f32 to vector<16x256xf32>
    %8 = arith.subf %7, %6 : vector<16x256xf32>
    %9 = math.exp %8 : vector<16x256xf32>
    %cst_7 = arith.constant 1.000000e+00 : f32
    %10 = vector.broadcast %cst_7 : f32 to vector<16x256xf32>
    %11 = arith.addf %10, %9 : vector<16x256xf32>
    %12 = tpu.reciprocal %11 {approx = true} : vector<16x256xf32> -> vector<16x256xf32>
    %13 = arith.mulf %6, %12 : vector<16x256xf32>
    %c0_8 = arith.constant 0 : index
    %c0_9 = arith.constant 0 : index
    %14 = vector.load %arg5[%c0_8, %c0_9] : memref<16x9xf32, #tpu.memory_space<vmem>>, vector<16x9xf32>
    %c17_i32 = arith.constant 17 : i32
    %15 = tpu.dynamic_rotate %13 by %c17_i32 dim 1 : vector<16x256xf32>, i32 -> vector<16x256xf32>
    %c0_10 = arith.constant 0 : index
    %c0_11 = arith.constant 0 : index
    %16 = vector.load %arg2[%c0_10, %c0_11] : memref<9x256xf32, #tpu.memory_space<vmem>>, vector<1x256xf32>
    %17 = vector.broadcast %16 : vector<1x256xf32> to vector<16x256xf32>
    %18 = arith.mulf %15, %17 : vector<16x256xf32>
    %19 = vector.extract_strided_slice %14 {offsets = [0, 0], sizes = [16, 1], strides = [1, 1]} : vector<16x9xf32> to vector<16x1xf32>
    %20 = vector.broadcast %19 : vector<16x1xf32> to vector<16x256xf32>
    %21 = arith.mulf %18, %20 : vector<16x256xf32>
    %c16_i32 = arith.constant 16 : i32
    %22 = tpu.dynamic_rotate %13 by %c16_i32 dim 1 : vector<16x256xf32>, i32 -> vector<16x256xf32>
    %c1 = arith.constant 1 : index
    %c0_12 = arith.constant 0 : index
    %23 = vector.load %arg2[%c1, %c0_12] : memref<9x256xf32, #tpu.memory_space<vmem>>, vector<1x256xf32>
    %24 = vector.broadcast %23 : vector<1x256xf32> to vector<16x256xf32>
    %25 = arith.mulf %22, %24 : vector<16x256xf32>
    %26 = vector.extract_strided_slice %14 {offsets = [0, 1], sizes = [16, 1], strides = [1, 1]} : vector<16x9xf32> to vector<16x1xf32>
    %27 = vector.broadcast %26 : vector<16x1xf32> to vector<16x256xf32>
    %28 = arith.mulf %25, %27 : vector<16x256xf32>
    %c15_i32 = arith.constant 15 : i32
    %29 = tpu.dynamic_rotate %13 by %c15_i32 dim 1 : vector<16x256xf32>, i32 -> vector<16x256xf32>
    %c2 = arith.constant 2 : index
    %c0_13 = arith.constant 0 : index
    %30 = vector.load %arg2[%c2, %c0_13] : memref<9x256xf32, #tpu.memory_space<vmem>>, vector<1x256xf32>
    %31 = vector.broadcast %30 : vector<1x256xf32> to vector<16x256xf32>
    %32 = arith.mulf %29, %31 : vector<16x256xf32>
    %33 = vector.extract_strided_slice %14 {offsets = [0, 2], sizes = [16, 1], strides = [1, 1]} : vector<16x9xf32> to vector<16x1xf32>
    %34 = vector.broadcast %33 : vector<16x1xf32> to vector<16x256xf32>
    %35 = arith.mulf %32, %34 : vector<16x256xf32>
    %c1_i32 = arith.constant 1 : i32
    %36 = tpu.dynamic_rotate %13 by %c1_i32 dim 1 : vector<16x256xf32>, i32 -> vector<16x256xf32>
    %c3 = arith.constant 3 : index
    %c0_14 = arith.constant 0 : index
    %37 = vector.load %arg2[%c3, %c0_14] : memref<9x256xf32, #tpu.memory_space<vmem>>, vector<1x256xf32>
    %38 = vector.broadcast %37 : vector<1x256xf32> to vector<16x256xf32>
    %39 = arith.mulf %36, %38 : vector<16x256xf32>
    %40 = vector.extract_strided_slice %14 {offsets = [0, 3], sizes = [16, 1], strides = [1, 1]} : vector<16x9xf32> to vector<16x1xf32>
    %41 = vector.broadcast %40 : vector<16x1xf32> to vector<16x256xf32>
    %42 = arith.mulf %39, %41 : vector<16x256xf32>
    %c4 = arith.constant 4 : index
    %c0_15 = arith.constant 0 : index
    %43 = vector.load %arg2[%c4, %c0_15] : memref<9x256xf32, #tpu.memory_space<vmem>>, vector<1x256xf32>
    %44 = vector.broadcast %43 : vector<1x256xf32> to vector<16x256xf32>
    %45 = arith.mulf %13, %44 : vector<16x256xf32>
    %46 = vector.extract_strided_slice %14 {offsets = [0, 4], sizes = [16, 1], strides = [1, 1]} : vector<16x9xf32> to vector<16x1xf32>
    %47 = vector.broadcast %46 : vector<16x1xf32> to vector<16x256xf32>
    %48 = arith.mulf %45, %47 : vector<16x256xf32>
    %c255_i32 = arith.constant 255 : i32
    %49 = tpu.dynamic_rotate %13 by %c255_i32 dim 1 : vector<16x256xf32>, i32 -> vector<16x256xf32>
    %c5 = arith.constant 5 : index
    %c0_16 = arith.constant 0 : index
    %50 = vector.load %arg2[%c5, %c0_16] : memref<9x256xf32, #tpu.memory_space<vmem>>, vector<1x256xf32>
    %51 = vector.broadcast %50 : vector<1x256xf32> to vector<16x256xf32>
    %52 = arith.mulf %49, %51 : vector<16x256xf32>
    %53 = vector.extract_strided_slice %14 {offsets = [0, 5], sizes = [16, 1], strides = [1, 1]} : vector<16x9xf32> to vector<16x1xf32>
    %54 = vector.broadcast %53 : vector<16x1xf32> to vector<16x256xf32>
    %55 = arith.mulf %52, %54 : vector<16x256xf32>
    %c241_i32 = arith.constant 241 : i32
    %56 = tpu.dynamic_rotate %13 by %c241_i32 dim 1 : vector<16x256xf32>, i32 -> vector<16x256xf32>
    %c6 = arith.constant 6 : index
    %c0_17 = arith.constant 0 : index
    %57 = vector.load %arg2[%c6, %c0_17] : memref<9x256xf32, #tpu.memory_space<vmem>>, vector<1x256xf32>
    %58 = vector.broadcast %57 : vector<1x256xf32> to vector<16x256xf32>
    %59 = arith.mulf %56, %58 : vector<16x256xf32>
    %60 = vector.extract_strided_slice %14 {offsets = [0, 6], sizes = [16, 1], strides = [1, 1]} : vector<16x9xf32> to vector<16x1xf32>
    %61 = vector.broadcast %60 : vector<16x1xf32> to vector<16x256xf32>
    %62 = arith.mulf %59, %61 : vector<16x256xf32>
    %c240_i32 = arith.constant 240 : i32
    %63 = tpu.dynamic_rotate %13 by %c240_i32 dim 1 : vector<16x256xf32>, i32 -> vector<16x256xf32>
    %c7 = arith.constant 7 : index
    %c0_18 = arith.constant 0 : index
    %64 = vector.load %arg2[%c7, %c0_18] : memref<9x256xf32, #tpu.memory_space<vmem>>, vector<1x256xf32>
    %65 = vector.broadcast %64 : vector<1x256xf32> to vector<16x256xf32>
    %66 = arith.mulf %63, %65 : vector<16x256xf32>
    %67 = vector.extract_strided_slice %14 {offsets = [0, 7], sizes = [16, 1], strides = [1, 1]} : vector<16x9xf32> to vector<16x1xf32>
    %68 = vector.broadcast %67 : vector<16x1xf32> to vector<16x256xf32>
    %69 = arith.mulf %66, %68 : vector<16x256xf32>
    %c239_i32 = arith.constant 239 : i32
    %70 = tpu.dynamic_rotate %13 by %c239_i32 dim 1 : vector<16x256xf32>, i32 -> vector<16x256xf32>
    %c8 = arith.constant 8 : index
    %c0_19 = arith.constant 0 : index
    %71 = vector.load %arg2[%c8, %c0_19] : memref<9x256xf32, #tpu.memory_space<vmem>>, vector<1x256xf32>
    %72 = vector.broadcast %71 : vector<1x256xf32> to vector<16x256xf32>
    %73 = arith.mulf %70, %72 : vector<16x256xf32>
    %74 = vector.extract_strided_slice %14 {offsets = [0, 8], sizes = [16, 1], strides = [1, 1]} : vector<16x9xf32> to vector<16x1xf32>
    %75 = vector.broadcast %74 : vector<16x1xf32> to vector<16x256xf32>
    %76 = arith.mulf %73, %75 : vector<16x256xf32>
    %77 = arith.addf %21, %28 : vector<16x256xf32>
    %78 = arith.addf %35, %42 : vector<16x256xf32>
    %79 = arith.addf %48, %55 : vector<16x256xf32>
    %80 = arith.addf %62, %69 : vector<16x256xf32>
    %81 = arith.addf %77, %78 : vector<16x256xf32>
    %82 = arith.addf %79, %80 : vector<16x256xf32>
    %83 = arith.addf %81, %82 : vector<16x256xf32>
    %84 = arith.addf %83, %76 : vector<16x256xf32>
    %c0_20 = arith.constant 0 : index
    %c0_21 = arith.constant 0 : index
    %85 = vector.load %arg6[%c0_20, %c0_21] : memref<16x1xf32, #tpu.memory_space<vmem>>, vector<16x1xf32>
    %86 = vector.broadcast %85 : vector<16x1xf32> to vector<16x256xf32>
    %87 = arith.addf %84, %86 : vector<16x256xf32>
    %cst_22 = arith.constant 0.000000e+00 : f32
    %88 = vector.broadcast %cst_22 : f32 to vector<16x256xf32>
    %89 = arith.subf %88, %87 : vector<16x256xf32>
    %90 = math.exp %89 : vector<16x256xf32>
    %cst_23 = arith.constant 1.000000e+00 : f32
    %91 = vector.broadcast %cst_23 : f32 to vector<16x256xf32>
    %92 = arith.addf %91, %90 : vector<16x256xf32>
    %93 = tpu.reciprocal %92 {approx = true} : vector<16x256xf32> -> vector<16x256xf32>
    %94 = arith.mulf %87, %93 : vector<16x256xf32>
    %cst_24 = arith.constant dense<0.000000e+00> : vector<16xf32>
    %95 = vector.multi_reduction <add>, %94, %cst_24 [1] : vector<16x256xf32> to vector<16xf32>
    %96 = vector.shape_cast %95 : vector<16xf32> to vector<16x1xf32>
    %cst_25 = arith.constant 2.560000e+02 : f32
    %97 = vector.broadcast %cst_25 : f32 to vector<16x1xf32>
    %98 = arith.divf %96, %97 : vector<16x1xf32>
    %c0_26 = arith.constant 0 : index
    %c0_27 = arith.constant 0 : index
    %99 = vector.load %arg7[%c0_26, %c0_27] : memref<16x1xf32, #tpu.memory_space<vmem>>, vector<16x1xf32>
    %100 = arith.mulf %98, %99 : vector<16x1xf32>
    %cst_28 = arith.constant dense<0.000000e+00> : vector<1xf32>
    %101 = vector.multi_reduction <add>, %100, %cst_28 [0] : vector<16x1xf32> to vector<1xf32>
    %102 = vector.shape_cast %101 : vector<1xf32> to vector<1x1xf32>
    %c0_29 = arith.constant 0 : index
    %c0_30 = arith.constant 0 : index
    %103 = vector.load %arg8[%c0_29, %c0_30] : memref<1x1xf32, #tpu.memory_space<vmem>>, vector<1x1xf32>
    %104 = arith.addf %102, %103 : vector<1x1xf32>
    %cst_31 = arith.constant 0.000000e+00 : f32
    %105 = vector.broadcast %cst_31 : f32 to vector<1x1xf32>
    %106 = arith.subf %105, %104 : vector<1x1xf32>
    %107 = math.exp %106 : vector<1x1xf32>
    %cst_32 = arith.constant 1.000000e+00 : f32
    %108 = vector.broadcast %cst_32 : f32 to vector<1x1xf32>
    %109 = arith.addf %108, %107 : vector<1x1xf32>
    %110 = tpu.reciprocal %109 {approx = true} : vector<1x1xf32> -> vector<1x1xf32>
    %111 = arith.mulf %104, %110 : vector<1x1xf32>
    %c0_33 = arith.constant 0 : index
    %c0_34 = arith.constant 0 : index
    %112 = vector.load %arg9[%c0_33, %c0_34] : memref<16x1xf32, #tpu.memory_space<vmem>>, vector<16x1xf32>
    %113 = vector.broadcast %111 : vector<1x1xf32> to vector<16x1xf32>
    %114 = arith.mulf %112, %113 : vector<16x1xf32>
    %cst_35 = arith.constant dense<0.000000e+00> : vector<16xf32>
    %115 = vector.multi_reduction <add>, %114, %cst_35 [1] : vector<16x1xf32> to vector<16xf32>
    %116 = vector.shape_cast %115 : vector<16xf32> to vector<16x1xf32>
    %c0_36 = arith.constant 0 : index
    %c0_37 = arith.constant 0 : index
    %117 = vector.load %arg10[%c0_36, %c0_37] : memref<16x1xf32, #tpu.memory_space<vmem>>, vector<16x1xf32>
    %118 = arith.addf %116, %117 : vector<16x1xf32>
    %cst_38 = arith.constant 0.000000e+00 : f32
    %119 = vector.broadcast %cst_38 : f32 to vector<16x1xf32>
    %120 = arith.subf %119, %118 : vector<16x1xf32>
    %121 = math.exp %120 : vector<16x1xf32>
    %cst_39 = arith.constant 1.000000e+00 : f32
    %122 = vector.broadcast %cst_39 : f32 to vector<16x1xf32>
    %123 = arith.addf %122, %121 : vector<16x1xf32>
    %124 = tpu.reciprocal %123 {approx = true} : vector<16x1xf32> -> vector<16x1xf32>
    %125 = vector.broadcast %124 : vector<16x1xf32> to vector<16x256xf32>
    %126 = arith.mulf %94, %125 : vector<16x256xf32>
    %c0_40 = arith.constant 0 : index
    %c0_41 = arith.constant 0 : index
    %127 = vector.load %arg11[%c0_40, %c0_41] : memref<4x16xf32, #tpu.memory_space<vmem>>, vector<4x16xf32>
    %cst_42 = arith.constant dense<0.000000e+00> : vector<4x256xf32>
    %128 = tpu.matmul %127, %126, %cst_42 {dimension_numbers = #tpu.dot_dimension_numbers<[1], [0], [0], [1], [0, 0, 1, 1], [], []>} : vector<4x16xf32>, vector<16x256xf32>, vector<4x256xf32> -> vector<4x256xf32>
    %c0_43 = arith.constant 0 : index
    %c0_44 = arith.constant 0 : index
    %129 = vector.load %arg12[%c0_43, %c0_44] : memref<4x1xf32, #tpu.memory_space<vmem>>, vector<4x1xf32>
    %130 = vector.broadcast %129 : vector<4x1xf32> to vector<4x256xf32>
    %131 = arith.addf %128, %130 : vector<4x256xf32>
    %132 = arith.addf %131, %1 : vector<4x256xf32>
    %c0_45 = arith.constant 0 : index
    %c0_46 = arith.constant 0 : index
    %c0_47 = arith.constant 0 : index
    %133 = vector.load %arg13[%c0_45, %c0_46, %c0_47] : memref<1x4x256xf32, #tpu.memory_space<vmem>>, vector<1x4x256xf32>
    %134 = vector.shape_cast %133 : vector<1x4x256xf32> to vector<4x256xf32>
    %135 = vector.shape_cast %132 : vector<4x256xf32> to vector<1x4x256xf32>
    tpu.vector_store %arg13[%c0_45, %c0_46, %c0_47], %135 {strides = array<i32>} : memref<1x4x256xf32, #tpu.memory_space<vmem>>, vector<1x4x256xf32>,
    return
  }
  func.func @transform_0(%arg0: i32) -> (i32, i32, i32) {
    %c0_i32 = arith.constant 0 : i32
    %c0_i32_0 = arith.constant 0 : i32
    %c0_i32_1 = arith.constant 0 : i32
    return %arg0, %c0_i32, %c0_i32_0 : i32, i32, i32
  }
  func.func @transform_1(%arg0: i32) -> (i32, i32) {
    %c0_i32 = arith.constant 0 : i32
    %c0_i32_0 = arith.constant 0 : i32
    %c0_i32_1 = arith.constant 0 : i32
    return %c0_i32, %c0_i32_0 : i32, i32
  }
  func.func @transform_2(%arg0: i32) -> (i32, i32) {
    %c0_i32 = arith.constant 0 : i32
    %c0_i32_0 = arith.constant 0 : i32
    %c0_i32_1 = arith.constant 0 : i32
    return %c0_i32, %c0_i32_0 : i32, i32
  }
  func.func @transform_3(%arg0: i32) -> (i32, i32) {
    %c0_i32 = arith.constant 0 : i32
    %c0_i32_0 = arith.constant 0 : i32
    %c0_i32_1 = arith.constant 0 : i32
    return %c0_i32, %c0_i32_0 : i32, i32
  }
  func.func @transform_4(%arg0: i32) -> (i32, i32) {
    %c0_i32 = arith.constant 0 : i32
    %c0_i32_0 = arith.constant 0 : i32
    %c0_i32_1 = arith.constant 0 : i32
    return %c0_i32, %c0_i32_0 : i32, i32
  }
  func.func @transform_5(%arg0: i32) -> (i32, i32) {
    %c0_i32 = arith.constant 0 : i32
    %c0_i32_0 = arith.constant 0 : i32
    %c0_i32_1 = arith.constant 0 : i32
    return %c0_i32, %c0_i32_0 : i32, i32
  }
  func.func @transform_6(%arg0: i32) -> (i32, i32) {
    %c0_i32 = arith.constant 0 : i32
    %c0_i32_0 = arith.constant 0 : i32
    %c0_i32_1 = arith.constant 0 : i32
    return %c0_i32, %c0_i32_0 : i32, i32
  }
  func.func @transform_7(%arg0: i32) -> (i32, i32) {
    %c0_i32 = arith.constant 0 : i32
    %c0_i32_0 = arith.constant 0 : i32
    %c0_i32_1 = arith.constant 0 : i32
    return %c0_i32, %c0_i32_0 : i32, i32
  }
  func.func @transform_8(%arg0: i32) -> (i32, i32) {
    %c0_i32 = arith.constant 0 : i32
    %c0_i32_0 = arith.constant 0 : i32
    %c0_i32_1 = arith.constant 0 : i32
    return %c0_i32, %c0_i32_0 : i32, i32
  }
  func.func @transform_9(%arg0: i32) -> (i32, i32) {
    %c0_i32 = arith.constant 0 : i32
    %c0_i32_0 = arith.constant 0 : i32
    %c0_i32_1 = arith.constant 0 : i32
    return %c0_i32, %c0_i32_0 : i32, i32
  }
  func.func @transform_10(%arg0: i32) -> (i32, i32) {
    %c0_i32 = arith.constant 0 : i32
    %c0_i32_0 = arith.constant 0 : i32
    %c0_i32_1 = arith.constant 0 : i32
    return %c0_i32, %c0_i32_0 : i32, i32
  }
  func.func @transform_11(%arg0: i32) -> (i32, i32) {
    %c0_i32 = arith.constant 0 : i32
    %c0_i32_0 = arith.constant 0 : i32
    %c0_i32_1 = arith.constant 0 : i32
    return %c0_i32, %c0_i32_0 : i32, i32
  }
  func.func @transform_12(%arg0: i32) -> (i32, i32, i32) {
    %c0_i32 = arith.constant 0 : i32
    %c0_i32_0 = arith.constant 0 : i32
    %c0_i32_1 = arith.constant 0 : i32
    return %arg0, %c0_i32, %c0_i32_0 : i32, i32, i32
  }
}

</mosaic_0001>

<llo_original>
// kernel: tpu_custom_call.1
$region0: #{tpu_custom_call.1}
  #allocation0 [shape = 'u32[]', space=smem, size = 0x4, offset = 0x4, fixed_abs, tag = 'smem constant byte address 0x4 - core index']
  #allocation1 [shape = 'u32[144,128]{1,0:T(1,128)}', space=vmem, size = 0x12000, scoped, tag = 'internal scratch']
  #allocation2 [shape = 'f32[1,1]{1,0:T(1,128)S(1)}', space=vmem, size = 0x200, scoped, tag = 'scoped memory for tpu_custom_call.1']
  %s0 = inlined_call_operand.vmem [shape: f32[2,4,256], index: 0, kind: input, shape index: {}]
  %s1 = inlined_call_operand.vmem [shape: f32[9,256], index: 1, kind: input, shape index: {}]
  %s2 = inlined_call_operand.vmem [shape: f32[16,4], index: 2, kind: input, shape index: {}]
  %s3 = inlined_call_operand.vmem [shape: f32[16,1], index: 3, kind: input, shape index: {}]
  %s4 = inlined_call_operand.vmem [shape: f32[16,9], index: 4, kind: input, shape index: {}]
  %s5 = inlined_call_operand.vmem [shape: f32[16,1], index: 5, kind: input, shape index: {}]
  %s6 = inlined_call_operand.vmem [shape: f32[16,1], index: 6, kind: input, shape index: {}]
  %s7 = inlined_call_operand.<no memory space> [shape: f32[1,1], index: 7, kind: input, shape index: {}]
  %s8 = inlined_call_operand.vmem [shape: f32[16,1], index: 8, kind: input, shape index: {}]
  %s9 = inlined_call_operand.vmem [shape: f32[16,1], index: 9, kind: input, shape index: {}]
  %s10 = inlined_call_operand.vmem [shape: f32[4,16], index: 10, kind: input, shape index: {}]
  %s11 = inlined_call_operand.vmem [shape: f32[4,1], index: 11, kind: input, shape index: {}]
  %s12 = inlined_call_operand.hbm [shape: f32[2,4,256], index: 12, kind: output, shape index: {}]
  %s13 = sld [smem:[#allocation0]]
  $region81: #{tpu_custom_call.1} parent=0
    _
  %s15 = ssub.s32 1, %s13
  %s16 = scalar_select 0, %s15, %s13
  %v17 = vstv %s7
  %18 = vst [vmem:[#allocation2] sm:$0x1] %v17
  $region1: #{tpu_custom_call.1} parent=0
    #allocation3 [shape = 'u8[8192]{0}', space=vmem, size = 0x2000, scoped, tag = 'output window, operand 0']
    #allocation4 [shape = 's32[2]{0}', space=sflag, size = 0x8, scoped, tag = 'scoped memory for tpu_custom_call.1']
    %19 = vsyncpa [#allocation4], 0
    %s20 = scalar_lea.sflag [#allocation4], 1
    %21 = vsyncpa %s20, 0
    loop: start=0, step=1, limit=4
    $region2: #{tpu_custom_call.1} parent=1 // loop_pre_header
      _
    $region3: #{tpu_custom_call.1} parent=1 // loop_header
      %s23 = sphi 0, %s27
      %p24 = scmp.ge.s32.totalorder %s23, 4
      %s33 = sphi 0, %s35
      %s36 = sphi 0, %s33
      %s37 = sphi 0, %s36
      %s53 = sphi 0, %s37
      %s57 = sphi 0, %s57
      %s59 = sphi 0, %s57
      %s60 = sphi 0, %s59
      %s74 = sphi 0, %s60
      %s78 = sphi 0, %s78
      %s80 = sphi 0, %s78
      %s81 = sphi 0, %s80
      %s95 = sphi 0, %s81
      %s99 = sphi 0, %s99
      %s101 = sphi 0, %s99
      %s102 = sphi 0, %s101
      %s116 = sphi 0, %s102
      %s120 = sphi 0, %s120
      %s122 = sphi 0, %s120
      %s123 = sphi 0, %s122
      %s137 = sphi 0, %s123
      %s141 = sphi 0, %s141
      %s143 = sphi 0, %s141
      %s144 = sphi 0, %s143
      %s158 = sphi 0, %s144
      %s162 = sphi 0, %s162
      %s164 = sphi 0, %s162
      %s165 = sphi 0, %s164
      %s179 = sphi 0, %s165
      %s183 = sphi 0, %s183
      %s185 = sphi 0, %s183
      %s186 = sphi 0, %s185
      %s200 = sphi 0, %s186
      %s204 = sphi 0, %s204
      %s206 = sphi 0, %s204
      %s207 = sphi 0, %s206
      %s221 = sphi 0, %s207
      %s225 = sphi 0, %s225
      %s227 = sphi 0, %s225
      %s228 = sphi 0, %s227
      %s242 = sphi 0, %s228
      %s246 = sphi 0, %s246
      %s248 = sphi 0, %s246
      %s249 = sphi 0, %s248
      %s263 = sphi 0, %s249
      %s267 = sphi 0, %s267
      %s269 = sphi 0, %s267
      %s270 = sphi 0, %s269
      %s284 = sphi 0, %s270
      %s290 = sphi 0, %s292
      %s293 = sphi 0, %s290
      %s294 = sphi 0, %s293
      %s310 = sphi 0, %s294
    $region4: #{tpu_custom_call.1} parent=1 // loop_header_branch
      %26 = sbr.rel (%p24) target = $region8
    $region5: #{tpu_custom_call.1} parent=1 // loop_body
      %s28 = ssub.s32 %s23, 1
      %s29 = ssub.s32 %s23, 2
      %s30 = sadd.s32 %s23, 1
      %s31 = ssub.s32 %s23, %s30
      %p32 = scmp.eq.s32.totalorder %s31, 0
      %s34 = sadd.s32 %s33, 1
      %s35 = scalar_select %p32, %s33, %s34
      %p38 = pneg %p32
      %p39 = scmp.eq.s32.totalorder %s23, 1
      %p40 = por %p38, %p39
      %p41 = scmp.ne.s32.totalorder %s33, %s36
      %p42 = scmp.eq.s32.totalorder %s23, 0
      %p43 = por %p41, %p42
      %p44 = scmp.ne.s32.totalorder %s33, %s36
      %p45 = scmp.eq.s32.totalorder %s28, 1
      %p46 = por %p44, %p45
      %p47 = scmp.ne.s32.totalorder %s36, %s37
      %p48 = scmp.eq.s32.totalorder %s28, 0
      %p49 = por %p47, %p48
      %p50 = scmp.ne.s32.totalorder %s36, %s37
      %p51 = scmp.eq.s32.totalorder %s29, 1
      %p52 = por %p50, %p51
      %p54 = scmp.ne.s32.totalorder %s37, %s53
      %p55 = scmp.eq.s32.totalorder %s29, 0
      %p56 = por %p54, %p55
      %s58 = sadd.s32 %s57, 1
      %p61 = scmp.eq.s32.totalorder %s23, 1
      %p62 = scmp.ne.s32.totalorder %s57, %s59
      %p63 = scmp.eq.s32.totalorder %s23, 0
      %p64 = por %p62, %p63
      %p65 = scmp.ne.s32.totalorder %s57, %s59
      %p66 = scmp.eq.s32.totalorder %s28, 1
      %p67 = por %p65, %p66
      %p68 = scmp.ne.s32.totalorder %s59, %s60
      %p69 = scmp.eq.s32.totalorder %s28, 0
      %p70 = por %p68, %p69
      %p71 = scmp.ne.s32.totalorder %s59, %s60
      %p72 = scmp.eq.s32.totalorder %s29, 1
      %p73 = por %p71, %p72
      %p75 = scmp.ne.s32.totalorder %s60, %s74
      %p76 = scmp.eq.s32.totalorder %s29, 0
      %p77 = por %p75, %p76
      %s79 = sadd.s32 %s78, 1
      %p82 = scmp.eq.s32.totalorder %s23, 1
      %p83 = scmp.ne.s32.totalorder %s78, %s80
      %p84 = scmp.eq.s32.totalorder %s23, 0
      %p85 = por %p83, %p84
      %p86 = scmp.ne.s32.totalorder %s78, %s80
      %p87 = scmp.eq.s32.totalorder %s28, 1
      %p88 = por %p86, %p87
      %p89 = scmp.ne.s32.totalorder %s80, %s81
      %p90 = scmp.eq.s32.totalorder %s28, 0
      %p91 = por %p89, %p90
      %p92 = scmp.ne.s32.totalorder %s80, %s81
      %p93 = scmp.eq.s32.totalorder %s29, 1
      %p94 = por %p92, %p93
      %p96 = scmp.ne.s32.totalorder %s81, %s95
      %p97 = scmp.eq.s32.totalorder %s29, 0
      %p98 = por %p96, %p97
      %s100 = sadd.s32 %s99, 1
      %p103 = scmp.eq.s32.totalorder %s23, 1
      %p104 = scmp.ne.s32.totalorder %s99, %s101
      %p105 = scmp.eq.s32.totalorder %s23, 0
      %p106 = por %p104, %p105
      %p107 = scmp.ne.s32.totalorder %s99, %s101
      %p108 = scmp.eq.s32.totalorder %s28, 1
      %p109 = por %p107, %p108
      %p110 = scmp.ne.s32.totalorder %s101, %s102
      %p111 = scmp.eq.s32.totalorder %s28, 0
      %p112 = por %p110, %p111
      %p113 = scmp.ne.s32.totalorder %s101, %s102
      %p114 = scmp.eq.s32.totalorder %s29, 1
      %p115 = por %p113, %p114
      %p117 = scmp.ne.s32.totalorder %s102, %s116
      %p118 = scmp.eq.s32.totalorder %s29, 0
      %p119 = por %p117, %p118
      %s121 = sadd.s32 %s120, 1
      %p124 = scmp.eq.s32.totalorder %s23, 1
      %p125 = scmp.ne.s32.totalorder %s120, %s122
      %p126 = scmp.eq.s32.totalorder %s23, 0
      %p127 = por %p125, %p126
      %p128 = scmp.ne.s32.totalorder %s120, %s122
      %p129 = scmp.eq.s32.totalorder %s28, 1
      %p130 = por %p128, %p129
      %p131 = scmp.ne.s32.totalorder %s122, %s123
      %p132 = scmp.eq.s32.totalorder %s28, 0
      %p133 = por %p131, %p132
      %p134 = scmp.ne.s32.totalorder %s122, %s123
      %p135 = scmp.eq.s32.totalorder %s29, 1
      %p136 = por %p134, %p135
      %p138 = scmp.ne.s32.totalorder %s123, %s137
      %p139 = scmp.eq.s32.totalorder %s29, 0
      %p140 = por %p138, %p139
      %s142 = sadd.s32 %s141, 1
      %p145 = scmp.eq.s32.totalorder %s23, 1
      %p146 = scmp.ne.s32.totalorder %s141, %s143
      %p147 = scmp.eq.s32.totalorder %s23, 0
      %p148 = por %p146, %p147
      %p149 = scmp.ne.s32.totalorder %s141, %s143
      %p150 = scmp.eq.s32.totalorder %s28, 1
      %p151 = por %p149, %p150
      %p152 = scmp.ne.s32.totalorder %s143, %s144
      %p153 = scmp.eq.s32.totalorder %s28, 0
      %p154 = por %p152, %p153
      %p155 = scmp.ne.s32.totalorder %s143, %s144
      %p156 = scmp.eq.s32.totalorder %s29, 1
      %p157 = por %p155, %p156
      %p159 = scmp.ne.s32.totalorder %s144, %s158
      %p160 = scmp.eq.s32.totalorder %s29, 0
      %p161 = por %p159, %p160
      %s163 = sadd.s32 %s162, 1
      %p166 = scmp.eq.s32.totalorder %s23, 1
      %p167 = scmp.ne.s32.totalorder %s162, %s164
      %p168 = scmp.eq.s32.totalorder %s23, 0
      %p169 = por %p167, %p168
      %p170 = scmp.ne.s32.totalorder %s162, %s164
      %p171 = scmp.eq.s32.totalorder %s28, 1
      %p172 = por %p170, %p171
      %p173 = scmp.ne.s32.totalorder %s164, %s165
      %p174 = scmp.eq.s32.totalorder %s28, 0
      %p175 = por %p173, %p174
      %p176 = scmp.ne.s32.totalorder %s164, %s165
      %p177 = scmp.eq.s32.totalorder %s29, 1
      %p178 = por %p176, %p177
      %p180 = scmp.ne.s32.totalorder %s165, %s179
      %p181 = scmp.eq.s32.totalorder %s29, 0
      %p182 = por %p180, %p181
      %s184 = sadd.s32 %s183, 1
      %p187 = scmp.eq.s32.totalorder %s23, 1
      %p188 = scmp.ne.s32.totalorder %s183, %s185
      %p189 = scmp.eq.s32.totalorder %s23, 0
      %p190 = por %p188, %p189
      %p191 = scmp.ne.s32.totalorder %s183, %s185
      %p192 = scmp.eq.s32.totalorder %s28, 1
      %p193 = por %p191, %p192
      %p194 = scmp.ne.s32.totalorder %s185, %s186
      %p195 = scmp.eq.s32.totalorder %s28, 0
      %p196 = por %p194, %p195
      %p197 = scmp.ne.s32.totalorder %s185, %s186
      %p198 = scmp.eq.s32.totalorder %s29, 1
      %p199 = por %p197, %p198
      %p201 = scmp.ne.s32.totalorder %s186, %s200
      %p202 = scmp.eq.s32.totalorder %s29, 0
      %p203 = por %p201, %p202
      %s205 = sadd.s32 %s204, 1
      %p208 = scmp.eq.s32.totalorder %s23, 1
      %p209 = scmp.ne.s32.totalorder %s204, %s206
      %p210 = scmp.eq.s32.totalorder %s23, 0
      %p211 = por %p209, %p210
      %p212 = scmp.ne.s32.totalorder %s204, %s206
      %p213 = scmp.eq.s32.totalorder %s28, 1
      %p214 = por %p212, %p213
      %p215 = scmp.ne.s32.totalorder %s206, %s207
      %p216 = scmp.eq.s32.totalorder %s28, 0
      %p217 = por %p215, %p216
      %p218 = scmp.ne.s32.totalorder %s206, %s207
      %p219 = scmp.eq.s32.totalorder %s29, 1
      %p220 = por %p218, %p219
      %p222 = scmp.ne.s32.totalorder %s207, %s221
      %p223 = scmp.eq.s32.totalorder %s29, 0
      %p224 = por %p222, %p223
      %s226 = sadd.s32 %s225, 1
      %p229 = scmp.eq.s32.totalorder %s23, 1
      %p230 = scmp.ne.s32.totalorder %s225, %s227
      %p231 = scmp.eq.s32.totalorder %s23, 0
      %p232 = por %p230, %p231
      %p233 = scmp.ne.s32.totalorder %s225, %s227
      %p234 = scmp.eq.s32.totalorder %s28, 1
      %p235 = por %p233, %p234
      %p236 = scmp.ne.s32.totalorder %s227, %s228
      %p237 = scmp.eq.s32.totalorder %s28, 0
      %p238 = por %p236, %p237
      %p239 = scmp.ne.s32.totalorder %s227, %s228
      %p240 = scmp.eq.s32.totalorder %s29, 1
      %p241 = por %p239, %p240
      %p243 = scmp.ne.s32.totalorder %s228, %s242
      %p244 = scmp.eq.s32.totalorder %s29, 0
      %p245 = por %p243, %p244
      %s247 = sadd.s32 %s246, 1
      %p250 = scmp.eq.s32.totalorder %s23, 1
      %p251 = scmp.ne.s32.totalorder %s246, %s248
      %p252 = scmp.eq.s32.totalorder %s23, 0
      %p253 = por %p251, %p252
      %p254 = scmp.ne.s32.totalorder %s246, %s248
      %p255 = scmp.eq.s32.totalorder %s28, 1
      %p256 = por %p254, %p255
      %p257 = scmp.ne.s32.totalorder %s248, %s249
      %p258 = scmp.eq.s32.totalorder %s28, 0
      %p259 = por %p257, %p258
      %p260 = scmp.ne.s32.totalorder %s248, %s249
      %p261 = scmp.eq.s32.totalorder %s29, 1
      %p262 = por %p260, %p261
      %p264 = scmp.ne.s32.totalorder %s249, %s263
      %p265 = scmp.eq.s32.totalorder %s29, 0
      %p266 = por %p264, %p265
      %s268 = sadd.s32 %s267, 1
      %p271 = scmp.eq.s32.totalorder %s23, 1
      %p272 = scmp.ne.s32.totalorder %s267, %s269
      %p273 = scmp.eq.s32.totalorder %s23, 0
      %p274 = por %p272, %p273
      %p275 = scmp.ne.s32.totalorder %s267, %s269
      %p276 = scmp.eq.s32.totalorder %s28, 1
      %p277 = por %p275, %p276
      %p278 = scmp.ne.s32.totalorder %s269, %s270
      %p279 = scmp.eq.s32.totalorder %s28, 0
      %p280 = por %p278, %p279
      %p281 = scmp.ne.s32.totalorder %s269, %s270
      %p282 = scmp.eq.s32.totalorder %s29, 1
      %p283 = por %p281, %p282
      %p285 = scmp.ne.s32.totalorder %s270, %s284
      %p286 = scmp.eq.s32.totalorder %s29, 0
      %p287 = por %p285, %p286
      %s288 = ssub.s32 %s23, %s30
      %p289 = scmp.eq.s32.totalorder %s288, 0
      %s291 = sadd.s32 %s290, 1
      %s292 = scalar_select %p289, %s290, %s291
      %p295 = pneg %p289
      %p296 = scmp.eq.s32.totalorder %s23, 1
      %p297 = por %p295, %p296
      %p298 = scmp.ne.s32.totalorder %s290, %s293
      %p299 = scmp.eq.s32.totalorder %s23, 0
      %p300 = por %p298, %p299
      %p301 = scmp.ne.s32.totalorder %s290, %s293
      %p302 = scmp.eq.s32.totalorder %s28, 1
      %p303 = por %p301, %p302
      %p304 = scmp.ne.s32.totalorder %s293, %s294
      %p305 = scmp.eq.s32.totalorder %s28, 0
      %p306 = por %p304, %p305
      %p307 = scmp.ne.s32.totalorder %s293, %s294
      %p308 = scmp.eq.s32.totalorder %s29, 1
      %p309 = por %p307, %p308
      %p311 = scmp.ne.s32.totalorder %s294, %s310
      %p312 = scmp.eq.s32.totalorder %s29, 0
      %p313 = por %p311, %p312
      %p314 = scmp.le.s32.totalorder 1, %s23
      %p315 = scmp.lt.s32.totalorder %s23, 3
      %p316 = pnand %p314, %p315
      %p317 = pneg %p316
      // Predicated region
      $region9: #{tpu_custom_call.1} parent=5 // pred_check
        _
      $region10: #{tpu_custom_call.1} parent=5 // pred_check_branch
        %319 = sbr.rel (%p316) target = $region12
      $region11: #{tpu_custom_call.1} parent=5 // pred_region
        %s320 = ssub.s32 %s23, 1
        // Predicated region
        $region13: #{tpu_custom_call.1} parent=11 // pred_check
          %p321 = pneg %p70
        $region14: #{tpu_custom_call.1} parent=11 // pred_check_branch
          %323 = sbr.rel (%p321) target = $region16
        $region15: #{tpu_custom_call.1} parent=11 // pred_region
          _
        $region16: #{tpu_custom_call.1} parent=11 // pred_fallthru
          _
        // Predicated region
        $region17: #{tpu_custom_call.1} parent=11 // pred_check
          %p324 = pneg %p91
        $region18: #{tpu_custom_call.1} parent=11 // pred_check_branch
          %326 = sbr.rel (%p324) target = $region20
        $region19: #{tpu_custom_call.1} parent=11 // pred_region
          _
        $region20: #{tpu_custom_call.1} parent=11 // pred_fallthru
          _
        // Predicated region
        $region21: #{tpu_custom_call.1} parent=11 // pred_check
          %p327 = pneg %p112
        $region22: #{tpu_custom_call.1} parent=11 // pred_check_branch
          %329 = sbr.rel (%p327) target = $region24
        $region23: #{tpu_custom_call.1} parent=11 // pred_region
          _
        $region24: #{tpu_custom_call.1} parent=11 // pred_fallthru
          _
        // Predicated region
        $region25: #{tpu_custom_call.1} parent=11 // pred_check
          %p330 = pneg %p133
        $region26: #{tpu_custom_call.1} parent=11 // pred_check_branch
          %332 = sbr.rel (%p330) target = $region28
        $region27: #{tpu_custom_call.1} parent=11 // pred_region
          _
        $region28: #{tpu_custom_call.1} parent=11 // pred_fallthru
          _
        // Predicated region
        $region29: #{tpu_custom_call.1} parent=11 // pred_check
          %p333 = pneg %p154
        $region30: #{tpu_custom_call.1} parent=11 // pred_check_branch
          %335 = sbr.rel (%p333) target = $region32
        $region31: #{tpu_custom_call.1} parent=11 // pred_region
          _
        $region32: #{tpu_custom_call.1} parent=11 // pred_fallthru
          _
        // Predicated region
        $region33: #{tpu_custom_call.1} parent=11 // pred_check
          %p336 = pneg %p175
        $region34: #{tpu_custom_call.1} parent=11 // pred_check_branch
          %338 = sbr.rel (%p336) target = $region36
        $region35: #{tpu_custom_call.1} parent=11 // pred_region
          _
        $region36: #{tpu_custom_call.1} parent=11 // pred_fallthru
          _
        // Predicated region
        $region37: #{tpu_custom_call.1} parent=11 // pred_check
          %p339 = pneg %p196
        $region38: #{tpu_custom_call.1} parent=11 // pred_check_branch
          %341 = sbr.rel (%p339) target = $region40
        $region39: #{tpu_custom_call.1} parent=11 // pred_region
          _
        $region40: #{tpu_custom_call.1} parent=11 // pred_fallthru
          _
        // Predicated region
        $region41: #{tpu_custom_call.1} parent=11 // pred_check
          %p342 = pneg %p217
        $region42: #{tpu_custom_call.1} parent=11 // pred_check_branch
          %344 = sbr.rel (%p342) target = $region44
        $region43: #{tpu_custom_call.1} parent=11 // pred_region
          _
        $region44: #{tpu_custom_call.1} parent=11 // pred_fallthru
          _
        // Predicated region
        $region45: #{tpu_custom_call.1} parent=11 // pred_check
          %p345 = pneg %p238
        $region46: #{tpu_custom_call.1} parent=11 // pred_check_branch
          %347 = sbr.rel (%p345) target = $region48
        $region47: #{tpu_custom_call.1} parent=11 // pred_region
          _
        $region48: #{tpu_custom_call.1} parent=11 // pred_fallthru
          _
        // Predicated region
        $region49: #{tpu_custom_call.1} parent=11 // pred_check
          %p348 = pneg %p259
        $region50: #{tpu_custom_call.1} parent=11 // pred_check_branch
          %350 = sbr.rel (%p348) target = $region52
        $region51: #{tpu_custom_call.1} parent=11 // pred_region
          _
        $region52: #{tpu_custom_call.1} parent=11 // pred_fallthru
          _
        // Predicated region
        $region53: #{tpu_custom_call.1} parent=11 // pred_check
          %p351 = pneg %p280
        $region54: #{tpu_custom_call.1} parent=11 // pred_check_branch
          %353 = sbr.rel (%p351) target = $region56
        $region55: #{tpu_custom_call.1} parent=11 // pred_region
          _
        $region56: #{tpu_custom_call.1} parent=11 // pred_fallthru
          _
      $region12: #{tpu_custom_call.1} parent=5 // pred_fallthru
        _
      %p354 = scmp.lt.s32.totalorder %s23, 2
      // Predicated region
      $region57: #{tpu_custom_call.1} parent=5 // pred_check
        %p355 = pneg %p354
      $region58: #{tpu_custom_call.1} parent=5 // pred_check_branch
        %357 = sbr.rel (%p355) target = $region60
      $region59: #{tpu_custom_call.1} parent=5 // pred_region
        // Predicated region
        $region61: #{tpu_custom_call.1} parent=59 // pred_check
          %p358 = pneg %p43
        $region62: #{tpu_custom_call.1} parent=59 // pred_check_branch
          %360 = sbr.rel (%p358) target = $region64
        $region63: #{tpu_custom_call.1} parent=59 // pred_region
          %p361 = scmp.lt.s32.totalorder %s23, 1
          %s362 = scalar_select %p361, %s23, 1
          %s363 = smul.addr %s362, 2
          %s364 = smul.addr %s363, 4
          %s365 = scalar_lea.vmem %s0, %s364
        $region64: #{tpu_custom_call.1} parent=59 // pred_fallthru
          _
      $region60: #{tpu_custom_call.1} parent=5 // pred_fallthru
        _
      %p366 = scmp.le.s32.totalorder 1, %s23
      %p367 = scmp.lt.s32.totalorder %s23, 3
      %p368 = pnand %p366, %p367
      %p369 = pneg %p368
      // Predicated region
      $region65: #{tpu_custom_call.1} parent=5 // pred_check
        _
      $region66: #{tpu_custom_call.1} parent=5 // pred_check_branch
        %371 = sbr.rel (%p368) target = $region68
      $region67: #{tpu_custom_call.1} parent=5 // pred_region
        %s372 = ssub.s32 %s23, 1
        %p373 = scmp.lt.s32.totalorder %s28, 1
        %s374 = scalar_select %p373, %s28, 1
        %s375 = smul.addr %s374, 2
        %s376 = smul.addr %s375, 4
        %s377 = scalar_lea.vmem %s0, %s376
        %p378 = pneg %p49
        %p379 = pneg %p46
        %p380 = pneg %p70
        %p381 = pneg %p67
        %p382 = pneg %p91
        %p383 = pneg %p88
        %p384 = pneg %p112
        %p385 = pneg %p109
        %p386 = pneg %p133
        %p387 = pneg %p130
        %p388 = pneg %p154
        %p389 = pneg %p151
        %p390 = pneg %p175
        %p391 = pneg %p172
        %p392 = pneg %p196
        %p393 = pneg %p193
        %p394 = pneg %p217
        %p395 = pneg %p214
        %p396 = pneg %p238
        %p397 = pneg %p235
        %p398 = pneg %p259
        %p399 = pneg %p256
        %p400 = pneg %p280
        %p401 = pneg %p277
        %p402 = pneg %p306
        %p403 = pneg %p303
        %s404 = sand.u32 %s293, 1
        %s405 = scalar_lea.sflag [#allocation4], %s404
        %s406 = sand.u32 %s293, 1
        %s407 = smul.addr %s406, 8
        %s408 = scalar_lea.vmem [#allocation3], %s407
        %p409 = scmp.lt.s32.totalorder %s28, 1
        %s410 = scalar_select %p409, %s28, 1
        %s411 = smul.addr %s410, 2
        %s412 = smul.addr %s411, 4
        %s413 = scalar_lea.vmem %s0, %s412
        %v414 = vld [vmem:[%s413] sm:$0xff]
        %v415 = vld [vmem:[%s2] sm:$0xff]
        %v416 = vld [vmem:[%s2 + $0x8] sm:$0xff]
        %v417 = vld [vmem:[%s3] sm:$0xff]
        %v418 = vld [vmem:[%s3 + $0x8] sm:$0xff]
        %420 = vset.pattern.permute.xlu0 0
        %421 = vperm.xlu0 %420, %v417
        %v422 = vpop.permute.xlu0 %421
        %425 = vset.pattern.permute.xlu0 0
        %426 = vperm.xlu0 %425, %v418
        %v427 = vpop.permute.xlu0 %426
        %v430 = vcombine.high %v414, %v414
        %vm431 = vcmask 31744
        %v433 = vsel %vm431, %v415, 0
        %v436 = vsel %vm431, %v416, 0
        %vm438 = vcmask 1043456
        %v439 = vsel %vm438, %v414, 0
        %v441 = vsel %vm438, %v430, 0
        %443 = vmatprep.subr.mxu0 0.0
        %444 = vmatpush1.msra.mxu0 0.0
        %445 = vmatprep.subr.mxu0 0.0
        %446 = vmatpush1.msra.mxu0 0.0
        %447 = vmatprep.subr.mxu0 0.0
        %448 = vmatpush1.msra.mxu0 0.0
        %449 = vmatprep.subr.mxu0 0.0
        %450 = vmatpush1.msra.mxu0 0.0
        %451 = vmatprep.subr.mxu0 0.0
        %452 = vmatpush1.msra.mxu0 0.0
        %453 = vmatprep.subr.mxu0 0.0
        %454 = vmatpush1.msra.mxu0 0.0
        %455 = vmatprep.subr.mxu0 0.0
        %456 = vmatpush1.msra.mxu0 0.0
        %457 = vmatprep.subr.mxu0 0.0
        %458 = vmatpush1.msra.mxu0 0.0
        %459 = vmatprep.subr.mxu0 0.0
        %460 = vmatpush1.msra.mxu0 0.0
        %461 = vmatprep.subr.mxu0 0.0
        %462 = vmatpush1.msra.mxu0 0.0
        %463 = vmatprep.subr.mxu0 0.0
        %464 = vmatpush1.msra.mxu0 0.0
        %465 = vmatprep.subr.mxu0 0.0
        %466 = vmatpush1.msra.mxu0 0.0
        %467 = vmatprep.subr.mxu0 0.0
        %468 = vmatpush1.msra.mxu0 0.0
        %469 = vmatprep.subr.mxu0 0.0
        %470 = vmatpush1.msra.mxu0 0.0
        %471 = vmatprep.subr.mxu0 0.0
        %472 = vmatpush1.msra.mxu0 0.0
        %473 = vmatprep.subr.mxu0 %v441
        %474 = vmatpush1.msra.mxu0 %v439
        %475 = vmatprep.subr.mxu0 0.0
        %476 = vmatpush2.msra.mxu0 0.0
        %477 = vmatprep.subr.mxu0 0.0
        %478 = vmatpush2.msra.mxu0 0.0
        %479 = vmatprep.subr.mxu0 0.0
        %480 = vmatpush2.msra.mxu0 0.0
        %481 = vmatprep.subr.mxu0 0.0
        %482 = vmatpush2.msra.mxu0 0.0
        %483 = vmatprep.subr.mxu0 0.0
        %484 = vmatpush2.msra.mxu0 0.0
        %485 = vmatprep.subr.mxu0 0.0
        %486 = vmatpush2.msra.mxu0 0.0
        %487 = vmatprep.subr.mxu0 0.0
        %488 = vmatpush2.msra.mxu0 0.0
        %489 = vmatprep.subr.mxu0 0.0
        %490 = vmatpush2.msra.mxu0 0.0
        %491 = vmatprep.subr.mxu0 0.0
        %492 = vmatpush2.msra.mxu0 0.0
        %493 = vmatprep.subr.mxu0 0.0
        %494 = vmatpush2.msra.mxu0 0.0
        %495 = vmatprep.subr.mxu0 0.0
        %496 = vmatpush2.msra.mxu0 0.0
        %497 = vmatprep.subr.mxu0 0.0
        %498 = vmatpush2.msra.mxu0 0.0
        %499 = vmatprep.subr.mxu0 0.0
        %500 = vmatpush2.msra.mxu0 0.0
        %501 = vmatprep.subr.mxu0 0.0
        %502 = vmatpush2.msra.mxu0 0.0
        %503 = vmatprep.subr.mxu0 0.0
        %504 = vmatpush2.msra.mxu0 0.0
        %505 = vmatprep.subr.mxu0 0.0
        %506 = vmatpush2.msra.mxu0 0.0
        %507 = vmatprep.mubr.f32.mxu0 0.0
        %508 = vmatmul.mubr.f32.gmra.mxu0 %v433
        %v509 = vpop.f32.mrf.mxu0
        %v510 = vadd.f32 %v422, %v509
        %v511 = vpop.f32.mrf.mxu0
        %v512 = vadd.f32 %v422, %v511
        %513 = vmatprep.mubr.f32.mxu0 0.0
        %514 = vmatmul.mubr.f32.gmra.mxu0 %v436
        %v515 = vpop.f32.mrf.mxu0
        %v516 = vadd.f32 %v427, %v515
        %v517 = vpop.f32.mrf.mxu0
        %v518 = vadd.f32 %v427, %v517
        %519 = vdwg.mxu0
        %v520 = vsub.f32 0.0, %v510
        %v521 = vsub.f32 0.0, %v512
        %v522 = vsub.f32 0.0, %v516
        %v523 = vsub.f32 0.0, %v518
        %v524 = vmul.f32 %v520, 1.442695
        %v525 = vpow.pop %v524
        %v526 = vmul.f32 %v521, 1.442695
        %v527 = vpow.pop %v526
        %v528 = vmul.f32 %v522, 1.442695
        %v529 = vpow.pop %v528
        %v530 = vmul.f32 %v523, 1.442695
        %v531 = vpow.pop %v530
        %v532 = vadd.f32 %v525, 1.0
        %v533 = vadd.f32 %v527, 1.0
        %v534 = vadd.f32 %v529, 1.0
        %v535 = vadd.f32 %v531, 1.0
        %v536 = vrcp.pop %v532
        %v537 = vrcp.pop %v533
        %v538 = vrcp.pop %v534
        %v539 = vrcp.pop %v535
        %v540 = vmul.f32 %v510, %v536
        %v541 = vmul.f32 %v512, %v537
        %v542 = vmul.f32 %v516, %v538
        %v543 = vmul.f32 %v518, %v539
        %v544 = vld [vmem:[%s4] sm:$0xff]
        %v545 = vld [vmem:[%s4 + $0x8] sm:$0xff]
        %546 = vrot.lane.b32.xlu0 %v540, 17
        %v547 = vpop.permute.xlu0 %546
        %548 = vrot.lane.b32.xlu0 %v542, 17
        %v549 = vpop.permute.xlu0 %548
        %550 = vrot.lane.b32.xlu0 %v541, 17
        %v551 = vpop.permute.xlu0 %550
        %552 = vrot.lane.b32.xlu0 %v543, 17
        %v553 = vpop.permute.xlu0 %552
        %v554 = vlaneseq
        %v555 = vand.u32 %v554, 127
        %vm556 = vcmp.lt.s32.totalorder %v555, 17
        %v557 = vsel %vm556, %v547, %v551
        %v558 = vsel %vm556, %v549, %v553
        %v559 = vsel %vm556, %v551, %v547
        %v560 = vsel %vm556, %v553, %v549
        %v561 = vld [vmem:[%s1] ss:$8 sm:$0x3]
        %v563 = vlaneseq
        %v564 = vshrl.u32 %v563, 7
        %v565 = vsub.s32 0, %v564
        %v566 = vrot.slane %v561, %v565
        %v567 = vlaneseq
        %v568 = vshrl.u32 %v567, 7
        %v569 = vsub.s32 1, %v568
        %v570 = vrot.slane %v561, %v569
        %v573 = vmul.f32 %v559, %v566
        %v574 = vmul.f32 %v557, %v570
        %v575 = vmul.f32 %v560, %v566
        %v576 = vmul.f32 %v558, %v570
        %578 = vset.pattern.permute.xlu0 0
        %579 = vperm.xlu0 %578, %v544
        %v580 = vpop.permute.xlu0 %579
        %583 = vset.pattern.permute.xlu0 0
        %584 = vperm.xlu0 %583, %v545
        %v585 = vpop.permute.xlu0 %584
        %v587 = vmul.f32 %v573, %v580
        %v588 = vmul.f32 %v574, %v580
        %v589 = vmul.f32 %v575, %v585
        %v590 = vmul.f32 %v576, %v585
        %591 = vrot.lane.b32.xlu0 %v540, 16
        %v592 = vpop.permute.xlu0 %591
        %593 = vrot.lane.b32.xlu0 %v542, 16
        %v594 = vpop.permute.xlu0 %593
        %595 = vrot.lane.b32.xlu0 %v541, 16
        %v596 = vpop.permute.xlu0 %595
        %597 = vrot.lane.b32.xlu0 %v543, 16
        %v598 = vpop.permute.xlu0 %597
        %vm599 = vcmp.lt.s32.totalorder %v555, 16
        %v600 = vsel %vm599, %v592, %v596
        %v601 = vsel %vm599, %v594, %v598
        %v602 = vsel %vm599, %v596, %v592
        %v603 = vsel %vm599, %v598, %v594
        %s604 = scalar_lea.vmem %s1, 1
        %v605 = vld [vmem:[%s604] ss:$8 sm:$0x3]
        %v607 = vlaneseq
        %v608 = vshrl.u32 %v607, 7
        %v609 = vsub.s32 0, %v608
        %v610 = vrot.slane %v605, %v609
        %v611 = vlaneseq
        %v612 = vshrl.u32 %v611, 7
        %v613 = vsub.s32 1, %v612
        %v614 = vrot.slane %v605, %v613
        %v617 = vmul.f32 %v602, %v610
        %v618 = vmul.f32 %v600, %v614
        %v619 = vmul.f32 %v603, %v610
        %v620 = vmul.f32 %v601, %v614
        %621 = vset.pattern.permute.xlu0 1
        %622 = vperm.xlu0 %621, %v544
        %v623 = vpop.permute.xlu0 %622
        %625 = vset.pattern.permute.xlu0 1
        %626 = vperm.xlu0 %625, %v545
        %v627 = vpop.permute.xlu0 %626
        %v629 = vmul.f32 %v617, %v623
        %v630 = vmul.f32 %v618, %v623
        %v631 = vmul.f32 %v619, %v627
        %v632 = vmul.f32 %v620, %v627
        %633 = vrot.lane.b32.xlu0 %v540, 15
        %v634 = vpop.permute.xlu0 %633
        %635 = vrot.lane.b32.xlu0 %v542, 15
        %v636 = vpop.permute.xlu0 %635
        %637 = vrot.lane.b32.xlu0 %v541, 15
        %v638 = vpop.permute.xlu0 %637
        %639 = vrot.lane.b32.xlu0 %v543, 15
        %v640 = vpop.permute.xlu0 %639
        %vm641 = vcmp.lt.s32.totalorder %v555, 15
        %v642 = vsel %vm641, %v634, %v638
        %v643 = vsel %vm641, %v636, %v640
        %v644 = vsel %vm641, %v638, %v634
        %v645 = vsel %vm641, %v640, %v636
        %s646 = scalar_lea.vmem %s1, 2
        %v647 = vld [vmem:[%s646] ss:$8 sm:$0x3]
        %v649 = vlaneseq
        %v650 = vshrl.u32 %v649, 7
        %v651 = vsub.s32 0, %v650
        %v652 = vrot.slane %v647, %v651
        %v653 = vlaneseq
        %v654 = vshrl.u32 %v653, 7
        %v655 = vsub.s32 1, %v654
        %v656 = vrot.slane %v647, %v655
        %v659 = vmul.f32 %v644, %v652
        %v660 = vmul.f32 %v642, %v656
        %v661 = vmul.f32 %v645, %v652
        %v662 = vmul.f32 %v643, %v656
        %663 = vset.pattern.permute.xlu0 2
        %664 = vperm.xlu0 %663, %v544
        %v665 = vpop.permute.xlu0 %664
        %667 = vset.pattern.permute.xlu0 2
        %668 = vperm.xlu0 %667, %v545
        %v669 = vpop.permute.xlu0 %668
        %v671 = vmul.f32 %v659, %v665
        %v672 = vmul.f32 %v660, %v665
        %v673 = vmul.f32 %v661, %v669
        %v674 = vmul.f32 %v662, %v669
        %675 = vrot.lane.b32.xlu0 %v540, 1
        %v676 = vpop.permute.xlu0 %675
        %677 = vrot.lane.b32.xlu0 %v542, 1
        %v678 = vpop.permute.xlu0 %677
        %679 = vrot.lane.b32.xlu0 %v541, 1
        %v680 = vpop.permute.xlu0 %679
        %681 = vrot.lane.b32.xlu0 %v543, 1
        %v682 = vpop.permute.xlu0 %681
        %vm683 = vcmp.lt.s32.totalorder %v555, 1
        %v684 = vsel %vm683, %v676, %v680
        %v685 = vsel %vm683, %v678, %v682
        %v686 = vsel %vm683, %v680, %v676
        %v687 = vsel %vm683, %v682, %v678
        %s688 = scalar_lea.vmem %s1, 3
        %v689 = vld [vmem:[%s688] ss:$8 sm:$0x3]
        %v691 = vlaneseq
        %v692 = vshrl.u32 %v691, 7
        %v693 = vsub.s32 0, %v692
        %v694 = vrot.slane %v689, %v693
        %v695 = vlaneseq
        %v696 = vshrl.u32 %v695, 7
        %v697 = vsub.s32 1, %v696
        %v698 = vrot.slane %v689, %v697
        %v701 = vmul.f32 %v686, %v694
        %v702 = vmul.f32 %v684, %v698
        %v703 = vmul.f32 %v687, %v694
        %v704 = vmul.f32 %v685, %v698
        %705 = vset.pattern.permute.xlu0 3
        %706 = vperm.xlu0 %705, %v544
        %v707 = vpop.permute.xlu0 %706
        %709 = vset.pattern.permute.xlu0 3
        %710 = vperm.xlu0 %709, %v545
        %v711 = vpop.permute.xlu0 %710
        %v713 = vmul.f32 %v701, %v707
        %v714 = vmul.f32 %v702, %v707
        %v715 = vmul.f32 %v703, %v711
        %v716 = vmul.f32 %v704, %v711
        %s717 = scalar_lea.vmem %s1, 4
        %v718 = vld [vmem:[%s717] ss:$8 sm:$0x3]
        %v720 = vlaneseq
        %v721 = vshrl.u32 %v720, 7
        %v722 = vsub.s32 0, %v721
        %v723 = vrot.slane %v718, %v722
        %v724 = vlaneseq
        %v725 = vshrl.u32 %v724, 7
        %v726 = vsub.s32 1, %v725
        %v727 = vrot.slane %v718, %v726
        %v730 = vmul.f32 %v540, %v723
        %v731 = vmul.f32 %v541, %v727
        %v732 = vmul.f32 %v542, %v723
        %v733 = vmul.f32 %v543, %v727
        %734 = vset.pattern.permute.xlu0 4
        %735 = vperm.xlu0 %734, %v544
        %v736 = vpop.permute.xlu0 %735
        %738 = vset.pattern.permute.xlu0 4
        %739 = vperm.xlu0 %738, %v545
        %v740 = vpop.permute.xlu0 %739
        %v742 = vmul.f32 %v730, %v736
        %v743 = vmul.f32 %v731, %v736
        %v744 = vmul.f32 %v732, %v740
        %v745 = vmul.f32 %v733, %v740
        %746 = vrot.lane.b32.xlu0 %v540, 127
        %v747 = vpop.permute.xlu0 %746
        %748 = vrot.lane.b32.xlu0 %v542, 127
        %v749 = vpop.permute.xlu0 %748
        %750 = vrot.lane.b32.xlu0 %v541, 127
        %v751 = vpop.permute.xlu0 %750
        %752 = vrot.lane.b32.xlu0 %v543, 127
        %v753 = vpop.permute.xlu0 %752
        %vm754 = vcmp.lt.s32.totalorder %v555, 127
        %v755 = vsel %vm754, %v747, %v751
        %v756 = vsel %vm754, %v749, %v753
        %v757 = vsel %vm754, %v751, %v747
        %v758 = vsel %vm754, %v753, %v749
        %s759 = scalar_lea.vmem %s1, 5
        %v760 = vld [vmem:[%s759] ss:$8 sm:$0x3]
        %v762 = vlaneseq
        %v763 = vshrl.u32 %v762, 7
        %v764 = vsub.s32 0, %v763
        %v765 = vrot.slane %v760, %v764
        %v766 = vlaneseq
        %v767 = vshrl.u32 %v766, 7
        %v768 = vsub.s32 1, %v767
        %v769 = vrot.slane %v760, %v768
        %v772 = vmul.f32 %v755, %v765
        %v773 = vmul.f32 %v757, %v769
        %v774 = vmul.f32 %v756, %v765
        %v775 = vmul.f32 %v758, %v769
        %776 = vset.pattern.permute.xlu0 5
        %777 = vperm.xlu0 %776, %v544
        %v778 = vpop.permute.xlu0 %777
        %780 = vset.pattern.permute.xlu0 5
        %781 = vperm.xlu0 %780, %v545
        %v782 = vpop.permute.xlu0 %781
        %v784 = vmul.f32 %v772, %v778
        %v785 = vmul.f32 %v773, %v778
        %v786 = vmul.f32 %v774, %v782
        %v787 = vmul.f32 %v775, %v782
        %788 = vrot.lane.b32.xlu0 %v540, 113
        %v789 = vpop.permute.xlu0 %788
        %790 = vrot.lane.b32.xlu0 %v542, 113
        %v791 = vpop.permute.xlu0 %790
        %792 = vrot.lane.b32.xlu0 %v541, 113
        %v793 = vpop.permute.xlu0 %792
        %794 = vrot.lane.b32.xlu0 %v543, 113
        %v795 = vpop.permute.xlu0 %794
        %vm796 = vcmp.lt.s32.totalorder %v555, 113
        %v797 = vsel %vm796, %v789, %v793
        %v798 = vsel %vm796, %v791, %v795
        %v799 = vsel %vm796, %v793, %v789
        %v800 = vsel %vm796, %v795, %v791
        %s801 = scalar_lea.vmem %s1, 6
        %v802 = vld [vmem:[%s801] ss:$8 sm:$0x3]
        %v804 = vlaneseq
        %v805 = vshrl.u32 %v804, 7
        %v806 = vsub.s32 0, %v805
        %v807 = vrot.slane %v802, %v806
        %v808 = vlaneseq
        %v809 = vshrl.u32 %v808, 7
        %v810 = vsub.s32 1, %v809
        %v811 = vrot.slane %v802, %v810
        %v814 = vmul.f32 %v797, %v807
        %v815 = vmul.f32 %v799, %v811
        %v816 = vmul.f32 %v798, %v807
        %v817 = vmul.f32 %v800, %v811
        %818 = vset.pattern.permute.xlu0 6
        %819 = vperm.xlu0 %818, %v544
        %v820 = vpop.permute.xlu0 %819
        %822 = vset.pattern.permute.xlu0 6
        %823 = vperm.xlu0 %822, %v545
        %v824 = vpop.permute.xlu0 %823
        %v826 = vmul.f32 %v814, %v820
        %v827 = vmul.f32 %v815, %v820
        %v828 = vmul.f32 %v816, %v824
        %v829 = vmul.f32 %v817, %v824
        %830 = vrot.lane.b32.xlu0 %v540, 112
        %v831 = vpop.permute.xlu0 %830
        %832 = vrot.lane.b32.xlu0 %v542, 112
        %v833 = vpop.permute.xlu0 %832
        %834 = vrot.lane.b32.xlu0 %v541, 112
        %v835 = vpop.permute.xlu0 %834
        %836 = vrot.lane.b32.xlu0 %v543, 112
        %v837 = vpop.permute.xlu0 %836
        %vm838 = vcmp.lt.s32.totalorder %v555, 112
        %v839 = vsel %vm838, %v831, %v835
        %v840 = vsel %vm838, %v833, %v837
        %v841 = vsel %vm838, %v835, %v831
        %v842 = vsel %vm838, %v837, %v833
        %s843 = scalar_lea.vmem %s1, 7
        %v844 = vld [vmem:[%s843] ss:$8 sm:$0x3]
        %v846 = vlaneseq
        %v847 = vshrl.u32 %v846, 7
        %v848 = vsub.s32 0, %v847
        %v849 = vrot.slane %v844, %v848
        %v850 = vlaneseq
        %v851 = vshrl.u32 %v850, 7
        %v852 = vsub.s32 1, %v851
        %v853 = vrot.slane %v844, %v852
        %v856 = vmul.f32 %v839, %v849
        %v857 = vmul.f32 %v841, %v853
        %v858 = vmul.f32 %v840, %v849
        %v859 = vmul.f32 %v842, %v853
        %860 = vset.pattern.permute.xlu0 7
        %861 = vperm.xlu0 %860, %v544
        %v862 = vpop.permute.xlu0 %861
        %864 = vset.pattern.permute.xlu0 7
        %865 = vperm.xlu0 %864, %v545
        %v866 = vpop.permute.xlu0 %865
        %v868 = vmul.f32 %v856, %v862
        %v869 = vmul.f32 %v857, %v862
        %v870 = vmul.f32 %v858, %v866
        %v871 = vmul.f32 %v859, %v866
        %872 = vrot.lane.b32.xlu0 %v540, 111
        %v873 = vpop.permute.xlu0 %872
        %874 = vrot.lane.b32.xlu0 %v542, 111
        %v875 = vpop.permute.xlu0 %874
        %876 = vrot.lane.b32.xlu0 %v541, 111
        %v877 = vpop.permute.xlu0 %876
        %878 = vrot.lane.b32.xlu0 %v543, 111
        %v879 = vpop.permute.xlu0 %878
        %vm880 = vcmp.lt.s32.totalorder %v555, 111
        %v881 = vsel %vm880, %v873, %v877
        %v882 = vsel %vm880, %v875, %v879
        %v883 = vsel %vm880, %v877, %v873
        %v884 = vsel %vm880, %v879, %v875
        %s885 = scalar_lea.vmem %s1, 16
        %v886 = vld [vmem:[%s885] ss:$8 sm:$0x3]
        %v888 = vlaneseq
        %v889 = vshrl.u32 %v888, 7
        %v890 = vsub.s32 0, %v889
        %v891 = vrot.slane %v886, %v890
        %v892 = vlaneseq
        %v893 = vshrl.u32 %v892, 7
        %v894 = vsub.s32 1, %v893
        %v895 = vrot.slane %v886, %v894
        %v898 = vmul.f32 %v881, %v891
        %v899 = vmul.f32 %v883, %v895
        %v900 = vmul.f32 %v882, %v891
        %v901 = vmul.f32 %v884, %v895
        %902 = vset.pattern.permute.xlu0 8
        %903 = vperm.xlu0 %902, %v544
        %v904 = vpop.permute.xlu0 %903
        %906 = vset.pattern.permute.xlu0 8
        %907 = vperm.xlu0 %906, %v545
        %v908 = vpop.permute.xlu0 %907
        %v910 = vmul.f32 %v898, %v904
        %v911 = vmul.f32 %v899, %v904
        %v912 = vmul.f32 %v900, %v908
        %v913 = vmul.f32 %v901, %v908
        %v914 = vadd.f32 %v587, %v629
        %v915 = vadd.f32 %v588, %v630
        %v916 = vadd.f32 %v589, %v631
        %v917 = vadd.f32 %v590, %v632
        %v918 = vadd.f32 %v671, %v713
        %v919 = vadd.f32 %v672, %v714
        %v920 = vadd.f32 %v673, %v715
        %v921 = vadd.f32 %v674, %v716
        %v922 = vadd.f32 %v742, %v784
        %v923 = vadd.f32 %v743, %v785
        %v924 = vadd.f32 %v744, %v786
        %v925 = vadd.f32 %v745, %v787
        %v926 = vadd.f32 %v826, %v868
        %v927 = vadd.f32 %v827, %v869
        %v928 = vadd.f32 %v828, %v870
        %v929 = vadd.f32 %v829, %v871
        %v930 = vadd.f32 %v914, %v918
        %v931 = vadd.f32 %v915, %v919
        %v932 = vadd.f32 %v916, %v920
        %v933 = vadd.f32 %v917, %v921
        %v934 = vadd.f32 %v922, %v926
        %v935 = vadd.f32 %v923, %v927
        %v936 = vadd.f32 %v924, %v928
        %v937 = vadd.f32 %v925, %v929
        %v938 = vadd.f32 %v930, %v934
        %v939 = vadd.f32 %v931, %v935
        %v940 = vadd.f32 %v932, %v936
        %v941 = vadd.f32 %v933, %v937
        %v942 = vadd.f32 %v938, %v910
        %v943 = vadd.f32 %v939, %v911
        %v944 = vadd.f32 %v940, %v912
        %v945 = vadd.f32 %v941, %v913
        %v946 = vld [vmem:[%s5] sm:$0xff]
        %v947 = vld [vmem:[%s5 + $0x8] sm:$0xff]
        %949 = vset.pattern.permute.xlu0 0
        %950 = vperm.xlu0 %949, %v946
        %v951 = vpop.permute.xlu0 %950
        %954 = vset.pattern.permute.xlu0 0
        %955 = vperm.xlu0 %954, %v947
        %v956 = vpop.permute.xlu0 %955
        %v958 = vadd.f32 %v942, %v951
        %v959 = vadd.f32 %v943, %v951
        %v960 = vadd.f32 %v944, %v956
        %v961 = vadd.f32 %v945, %v956
        %v962 = vsub.f32 0.0, %v958
        %v963 = vsub.f32 0.0, %v959
        %v964 = vsub.f32 0.0, %v960
        %v965 = vsub.f32 0.0, %v961
        %v966 = vmul.f32 %v962, 1.442695
        %v967 = vpow.pop %v966
        %v968 = vmul.f32 %v963, 1.442695
        %v969 = vpow.pop %v968
        %v970 = vmul.f32 %v964, 1.442695
        %v971 = vpow.pop %v970
        %v972 = vmul.f32 %v965, 1.442695
        %v973 = vpow.pop %v972
        %v974 = vadd.f32 %v967, 1.0
        %v975 = vadd.f32 %v969, 1.0
        %v976 = vadd.f32 %v971, 1.0
        %v977 = vadd.f32 %v973, 1.0
        %v978 = vrcp.pop %v974
        %v979 = vrcp.pop %v975
        %v980 = vrcp.pop %v976
        %v981 = vrcp.pop %v977
        %v982 = vmul.f32 %v958, %v978
        %v983 = vmul.f32 %v959, %v979
        %v984 = vmul.f32 %v960, %v980
        %v985 = vmul.f32 %v961, %v981
        %v986 = vadd.f32 %v982, %v983
        %987 = vadd.xlane.f32.xlu0 %v986
        %v988 = vpop.xlane.xlu0 %987
        %v989 = vadd.f32 %v984, %v985
        %990 = vadd.xlane.f32.xlu0 %v989
        %v991 = vpop.xlane.xlu0 %990
        %v992 = vrcp.pop 256.0
        %v993 = vmul.f32 %v988, %v992
        %v994 = vmul.f32 %v991, %v992
        %v995 = vld [vmem:[%s6] sm:$0xff]
        %v996 = vld [vmem:[%s6 + $0x8] sm:$0xff]
        %v997 = vmul.f32 %v993, %v995
        %v998 = vmul.f32 %v994, %v996
        %vm999 = vcmask 7168
        %v1000 = vsel %vm999, %v997, 0.0
        %v1001 = vsel %vm999, %v998, 0.0
        %v1002 = vadd.f32 %v1000, %v1001
        %v1003 = vrot.slane %v1002, 4
        %v1004 = vadd.f32 %v1002, %v1003
        %v1005 = vrot.slane %v1004, 2
        %v1006 = vadd.f32 %v1004, %v1005
        %v1007 = vrot.slane %v1006, 1
        %v1008 = vadd.f32 %v1006, %v1007
        %v1009 = vld [vmem:[#allocation2] sm:$0x1]
        %v1010 = vadd.f32 %v1008, %v1009
        %v1011 = vsub.f32 0.0, %v1010
        %v1012 = vmul.f32 %v1011, 1.442695
        %v1013 = vpow.pop %v1012
        %v1014 = vadd.f32 %v1013, 1.0
        %v1015 = vrcp.pop %v1014
        %v1016 = vmul.f32 %v1010, %v1015
        %v1017 = vld [vmem:[%s8] sm:$0xff]
        %v1018 = vld [vmem:[%s8 + $0x8] sm:$0xff]
        %v1019 = vlaneseq
        %v1020 = vshrl.u32 %v1019, 7
        %v1021 = vsub.s32 0, %v1020
        %v1022 = vrot.slane %v1016, %v1021
        %v1023 = vmul.f32 %v1017, %v1022
        %v1024 = vmul.f32 %v1018, %v1022
        %v1025 = vadd.f32 %v1023, 0.0
        %v1026 = vadd.f32 %v1024, 0.0
        %v1027 = vld [vmem:[%s9] sm:$0xff]
        %v1028 = vld [vmem:[%s9 + $0x8] sm:$0xff]
        %v1029 = vadd.f32 %v1025, %v1027
        %v1030 = vadd.f32 %v1026, %v1028
        %v1031 = vsub.f32 0.0, %v1029
        %v1032 = vsub.f32 0.0, %v1030
        %v1033 = vmul.f32 %v1031, 1.442695
        %v1034 = vpow.pop %v1033
        %v1035 = vmul.f32 %v1032, 1.442695
        %v1036 = vpow.pop %v1035
        %v1037 = vadd.f32 %v1034, 1.0
        %v1038 = vadd.f32 %v1036, 1.0
        %v1039 = vrcp.pop %v1037
        %v1040 = vrcp.pop %v1038
        %1042 = vset.pattern.permute.xlu0 0
        %1043 = vperm.xlu0 %1042, %v1039
        %v1044 = vpop.permute.xlu0 %1043
        %1047 = vset.pattern.permute.xlu0 0
        %1048 = vperm.xlu0 %1047, %v1040
        %v1049 = vpop.permute.xlu0 %1048
        %v1051 = vmul.f32 %v982, %v1044
        %v1052 = vmul.f32 %v983, %v1044
        %v1053 = vmul.f32 %v984, %v1049
        %v1054 = vmul.f32 %v985, %v1049
        %v1055 = vld [vmem:[%s10] sm:$0xf]
        %v1056 = vld [vmem:[%s11] sm:$0xf]
        %1058 = vset.pattern.permute.xlu0 0
        %1059 = vperm.xlu0 %1058, %v1056
        %v1060 = vpop.permute.xlu0 %1059
        %vm1062 = vcmask 130048
        %v1064 = vsel %vm1062, %v1055, 0
        %1066 = vmatprep.subr.mxu0 0.0
        %1067 = vmatpush1.msra.mxu0 0.0
        %1068 = vmatprep.subr.mxu0 0.0
        %1069 = vmatpush1.msra.mxu0 0.0
        %1070 = vmatprep.subr.mxu0 0.0
        %1071 = vmatpush1.msra.mxu0 0.0
        %1072 = vmatprep.subr.mxu0 0.0
        %1073 = vmatpush1.msra.mxu0 0.0
        %1074 = vmatprep.subr.mxu0 0.0
        %1075 = vmatpush1.msra.mxu0 0.0
        %1076 = vmatprep.subr.mxu0 0.0
        %1077 = vmatpush1.msra.mxu0 0.0
        %1078 = vmatprep.subr.mxu0 0.0
        %1079 = vmatpush1.msra.mxu0 0.0
        %1080 = vmatprep.subr.mxu0 0.0
        %1081 = vmatpush1.msra.mxu0 0.0
        %1082 = vmatprep.subr.mxu0 0.0
        %1083 = vmatpush1.msra.mxu0 0.0
        %1084 = vmatprep.subr.mxu0 0.0
        %1085 = vmatpush1.msra.mxu0 0.0
        %1086 = vmatprep.subr.mxu0 0.0
        %1087 = vmatpush1.msra.mxu0 0.0
        %1088 = vmatprep.subr.mxu0 0.0
        %1089 = vmatpush1.msra.mxu0 0.0
        %1090 = vmatprep.subr.mxu0 0.0
        %1091 = vmatpush1.msra.mxu0 0.0
        %1092 = vmatprep.subr.mxu0 0.0
        %1093 = vmatpush1.msra.mxu0 0.0
        %1094 = vmatprep.subr.mxu0 %v1054
        %1095 = vmatpush1.msra.mxu0 %v1053
        %1096 = vmatprep.subr.mxu0 %v1052
        %1097 = vmatpush1.msra.mxu0 %v1051
        %1098 = vmatprep.subr.mxu0 0.0
        %1099 = vmatpush2.msra.mxu0 0.0
        %1100 = vmatprep.subr.mxu0 0.0
        %1101 = vmatpush2.msra.mxu0 0.0
        %1102 = vmatprep.subr.mxu0 0.0
        %1103 = vmatpush2.msra.mxu0 0.0
        %1104 = vmatprep.subr.mxu0 0.0
        %1105 = vmatpush2.msra.mxu0 0.0
        %1106 = vmatprep.subr.mxu0 0.0
        %1107 = vmatpush2.msra.mxu0 0.0
        %1108 = vmatprep.subr.mxu0 0.0
        %1109 = vmatpush2.msra.mxu0 0.0
        %1110 = vmatprep.subr.mxu0 0.0
        %1111 = vmatpush2.msra.mxu0 0.0
        %1112 = vmatprep.subr.mxu0 0.0
        %1113 = vmatpush2.msra.mxu0 0.0
        %1114 = vmatprep.subr.mxu0 0.0
        %1115 = vmatpush2.msra.mxu0 0.0
        %1116 = vmatprep.subr.mxu0 0.0
        %1117 = vmatpush2.msra.mxu0 0.0
        %1118 = vmatprep.subr.mxu0 0.0
        %1119 = vmatpush2.msra.mxu0 0.0
        %1120 = vmatprep.subr.mxu0 0.0
        %1121 = vmatpush2.msra.mxu0 0.0
        %1122 = vmatprep.subr.mxu0 0.0
        %1123 = vmatpush2.msra.mxu0 0.0
        %1124 = vmatprep.subr.mxu0 0.0
        %1125 = vmatpush2.msra.mxu0 0.0
        %1126 = vmatprep.subr.mxu0 0.0
        %1127 = vmatpush2.msra.mxu0 0.0
        %1128 = vmatprep.subr.mxu0 0.0
        %1129 = vmatpush2.msra.mxu0 0.0
        %1130 = vmatprep.mubr.f32.mxu0 0.0
        %1131 = vmatmul.mubr.f32.gmra.mxu0 %v1064
        %v1132 = vpop.f32.mrf.mxu0
        %v1133 = vadd.f32 %v1060, %v1132
        %v1134 = vpop.f32.mrf.mxu0
        %v1135 = vadd.f32 %v1060, %v1134
        %1136 = vdwg.mxu0
        %v1138 = vadd.f32 %v1133, %v414
        %v1139 = vadd.f32 %v1135, %v430
        %v1142 = vcombine.low %v1138, %v1139
        %1144 = vst [vmem:[%s408] sm:$0xff] %v1142
        %s1145 = sand.u32 %s293, 1
        %s1146 = scalar_lea.sflag [#allocation4], %s1145
        %s1147 = sand.u32 %s293, 1
        %s1148 = smul.addr %s1147, 8
        %s1149 = scalar_lea.vmem [#allocation3], %s1148
        // Predicated region
        $region69: #{tpu_custom_call.1} parent=67 // pred_check
          %p1150 = pneg %p303
        $region70: #{tpu_custom_call.1} parent=67 // pred_check_branch
          %1152 = sbr.rel (%p1150) target = $region72
        $region71: #{tpu_custom_call.1} parent=67 // pred_region
          %s1154 = ssub.s32 128, 128
          %1155 = vsyncadd %s1146, %s1154
          %s1156 = smul.addr %s28, 2
          %s1157 = smul.addr %s1156, 64
          %s1158 = scalar_lea.hbm %s12, %s1157
          %s1160 = sshll.u32 %s1149, 4
          %s1161 = int_to_ptr.vmem [resolvable:$true] %s1160
          %1163 = dma.vmem_to_hbm [thread:$0]  %s1161, 128, %s1158, %s1146
        $region72: #{tpu_custom_call.1} parent=67 // pred_fallthru
          _
      $region68: #{tpu_custom_call.1} parent=5 // pred_fallthru
        _
      %p1164 = scmp.le.s32.totalorder 2, %s23
      // Predicated region
      $region73: #{tpu_custom_call.1} parent=5 // pred_check
        %p1165 = pneg %p1164
      $region74: #{tpu_custom_call.1} parent=5 // pred_check_branch
        %1167 = sbr.rel (%p1165) target = $region76
      $region75: #{tpu_custom_call.1} parent=5 // pred_region
        %s1168 = ssub.s32 %s23, 2
        // Predicated region
        $region77: #{tpu_custom_call.1} parent=75 // pred_check
          %p1169 = pneg %p309
        $region78: #{tpu_custom_call.1} parent=75 // pred_check_branch
          %1171 = sbr.rel (%p1169) target = $region80
        $region79: #{tpu_custom_call.1} parent=75 // pred_region
          %s1172 = sand.u32 %s294, 1
          %s1173 = scalar_lea.sflag [#allocation4], %s1172
          %s1174 = sand.u32 %s294, 1
          %s1175 = smul.addr %s1174, 8
          %s1176 = scalar_lea.vmem [#allocation3], %s1175
          %1177 = dma.done %s1173, 128
        $region80: #{tpu_custom_call.1} parent=75 // pred_fallthru
          _
      $region76: #{tpu_custom_call.1} parent=5 // pred_fallthru
        _
    $region6: #{tpu_custom_call.1} parent=1 // loop_footer
      %s27 = sadd.s32 1, %s23
    $region7: #{tpu_custom_call.1} parent=1 // loop_footer_branch
      %22 = sbr.rel target = $region3
    $region8: #{tpu_custom_call.1} parent=1 // loop_exit
      _
    %1178 = vsyncpa [#allocation4], 1
    %s1179 = scalar_lea.sflag [#allocation4], 1
    %1180 = vsyncpa %s1179, 1

</llo_original>
